<compile_context>
chip_gen: v7x
topology: tpu7x:2x2x1
jax: 0.10.0
libtpu: 0.0.40
codegen_flags: <defaults>
</compile_context>

<pallas_src>
import functools

import jax
import jax.numpy as jnp
from jax.experimental import pallas as pl
from jax.experimental.pallas import tpu as pltpu

_EPS = 1e-5                   # nn.BatchNorm2d default eps
_MXU_DTYPE = jnp.bfloat16     # MXU input / conv-output storage dtype
_HALO = 128                   # lane halo; covers |tap shift| <= W+3 for W <= 125
_MAX_TM = 2048                # lane tile cap
_VMEM_BUDGET = 6 << 20        # double-buffered stream budget (v5e-safe)


# ----------------------------- small helpers -----------------------------

def _cdiv(a, b):
    return -(-a // b)


def _cores_per_chip():
    try:
        return max(1, int(getattr(jax.devices()[0], "num_cores", 1)))
    except Exception:
        return 1


def _choose_tiles(min_lanes, per_lane_bytes, cores):
    """Lane tile (multiple of 128) and block count.

    Keeps per-block padding < 128 lanes (no padding blow-up), respects the
    VMEM stream budget, and targets >= `cores` blocks so both v7x TensorCores
    can be used on the "parallel" M axis.
    """
    mp = _cdiv(min_lanes, 128) * 128
    cap = min(_MAX_TM,
              max(128, (_VMEM_BUDGET // max(1, per_lane_bytes)) // 128 * 128))
    nblk = _cdiv(mp, cap)
    if cores > 1 and mp >= cores * 128:
        nblk = max(nblk, cores)
    tm = _cdiv(_cdiv(mp, nblk), 128) * 128
    return tm, nblk


# ----------------------------- Pallas kernels -----------------------------

def _lane_partials(vals, cout, tm):
    """Lane-group partial sum / sum-of-squares of a (cout, tm) f32 tile.

    Aligned 128-lane VPU adds only; the tiny cross-lane reduction of the
    (cout, 128*nblocks) partials happens once in JAX glue.
    """
    ps = jnp.zeros((cout, 128), jnp.float32)
    pq = jnp.zeros((cout, 128), jnp.float32)
    for g in range(tm // 128):
        blk = vals[:, g * 128:(g + 1) * 128]
        ps = ps + blk
        pq = pq + blk * blk
    return ps, pq


def _make_fused_conv_kernel(offsets, apply_act):
    """3x3 conv on the padded-flat layout with the nine taps folded in.

    Optionally applies relu(x*scale+shift)*mask to the ingested window (fusing
    the previous layer's BatchNorm+ReLU into this conv's tile ingestion) and
    emits masked per-block partial batch statistics of this conv's output.
    """
    def kernel(x_m, x_l, x_r, m_m, m_l, m_r, w_ref, sc_ref, sh_ref,
               o_ref, ps_ref, pq_ref):
        cout, tm = o_ref.shape
        # aligned main tile + two aligned 128-lane halos -> full shift window
        xw = jnp.concatenate([x_l[...], x_m[...], x_r[...]],
                             axis=1).astype(jnp.float32)
        if apply_act:
            mw = jnp.concatenate([m_l[...], m_m[...], m_r[...]], axis=1)
            xw = jnp.maximum(xw * sc_ref[...] + sh_ref[...], 0.0) * mw
        xw = xw.astype(_MXU_DTYPE)
        acc = jnp.zeros((cout, tm), jnp.float32)
        for t, off in enumerate(offsets):            # 9 static lane shifts
            tap = xw[:, _HALO + off:_HALO + off + tm]
            acc = acc + jnp.dot(w_ref[t], tap,
                                preferred_element_type=jnp.float32)
        o_ref[...] = acc.astype(o_ref.dtype)          # bf16 writeback
        ps, pq = _lane_partials(acc * m_m[...], cout, tm)   # masked stats
        ps_ref[...] = ps
        pq_ref[...] = pq
    return kernel


def _matmul_stats_kernel(w_ref, p_ref, o_ref, ps_ref, pq_ref):
    # im2col fallback (stride-2 conv1): W[C,K] @ P[K,TM] with per-block partial
    # statistics; zero-padded lanes contribute exactly zero to both.
    cout, tm = o_ref.shape
    acc = jnp.dot(w_ref[...], p_ref[...], preferred_element_type=jnp.float32)
    o_ref[...] = acc.astype(o_ref.dtype)
    ps, pq = _lane_partials(acc, cout, tm)
    ps_ref[...] = ps
    pq_ref[...] = pq


def _final_res_kernel(y_ref, sc_ref, sh_ref, r_ref, o_ref):
    # relu(y*scale + shift + residual)   (identity shortcut)
    v = (y_ref[...].astype(jnp.float32) * sc_ref[...] + sh_ref[...]
         + r_ref[...].astype(jnp.float32))
    o_ref[...] = jnp.maximum(v, 0.0).astype(o_ref.dtype)


def _final_proj_kernel(y_ref, sc_ref, sh_ref, w3_ref, xs_ref, b3_ref, o_ref):
    # relu(y*scale + shift + (W3 @ Xs + b3))   (projection shortcut, fused)
    skip = jnp.dot(w3_ref[...], xs_ref[...],
                   preferred_element_type=jnp.float32) + b3_ref[...]
    v = y_ref[...].astype(jnp.float32) * sc_ref[...] + sh_ref[...] + skip
    o_ref[...] = jnp.maximum(v, 0.0).astype(o_ref.dtype)


# ----------------------------- Pallas wrappers -----------------------------

def fused_conv3x3(x_flat, mask_flat, w_taps, scale_in, shift_in, geo, *,
                  apply_act):
    """Fused 3x3 conv (stride 1, padding 1) on the padded-flat layout."""
    cin, length = x_flat.shape
    cout = w_taps.shape[1]
    tm, nblk, wp = geo["tm"], geo["nblk"], geo["wp"]
    assert length == tm * nblk
    r = tm // 128
    last = length // 128 - 1
    offsets = tuple((kh - 1) * wp + (kw - 1)
                    for kh in range(3) for kw in range(3))

    main = lambda i: (0, i)
    # halo clamping at the array edges only ever affects masked pad lanes
    left = lambda i: (0, jnp.maximum(i * r - 1, 0))
    right = lambda i: (0, jnp.minimum((i + 1) * r, last))

    y, ps, pq = pl.pallas_call(
        _make_fused_conv_kernel(offsets, apply_act),
        out_shape=(jax.ShapeDtypeStruct((cout, length), _MXU_DTYPE),
                   jax.ShapeDtypeStruct((cout, 128 * nblk), jnp.float32),
                   jax.ShapeDtypeStruct((cout, 128 * nblk), jnp.float32)),
        grid=(nblk,),
        in_specs=[pl.BlockSpec((cin, tm), main),
                  pl.BlockSpec((cin, 128), left),
                  pl.BlockSpec((cin, 128), right),
                  pl.BlockSpec((1, tm), main),
                  pl.BlockSpec((1, 128), left),
                  pl.BlockSpec((1, 128), right),
                  pl.BlockSpec((9, cout, cin), lambda i: (0, 0, 0)),
                  pl.BlockSpec((cin, 1), lambda i: (0, 0)),
                  pl.BlockSpec((cin, 1), lambda i: (0, 0))],
        out_specs=(pl.BlockSpec((cout, tm), main),
                   pl.BlockSpec((cout, 128), main),
                   pl.BlockSpec((cout, 128), main)),
        compiler_params=pltpu.CompilerParams(
            dimension_semantics=("parallel",)),
    )(x_flat, x_flat, x_flat, mask_flat, mask_flat, mask_flat,
      w_taps, scale_in, shift_in)
    return y, ps.sum(axis=1), pq.sum(axis=1)


def matmul_stats(wmat, patches, cores):
    """[C,K] @ [K,M] on the MXU with fused per-block partial sum / sumsq."""
    cout, k = wmat.shape
    m = patches.shape[1]
    per_lane = (k * 2 + cout * 2) * 2
    tm, nblk = _choose_tiles(m, per_lane, cores)
    mp = tm * nblk
    if mp != m:
        patches = jnp.pad(patches, ((0, 0), (0, mp - m)))
    y, ps, pq = pl.pallas_call(
        _matmul_stats_kernel,
        out_shape=(jax.ShapeDtypeStruct((cout, mp), _MXU_DTYPE),
                   jax.ShapeDtypeStruct((cout, 128 * nblk), jnp.float32),
                   jax.ShapeDtypeStruct((cout, 128 * nblk), jnp.float32)),
        grid=(nblk,),
        in_specs=[pl.BlockSpec((cout, k), lambda i: (0, 0)),
                  pl.BlockSpec((k, tm), lambda i: (0, i))],
        out_specs=(pl.BlockSpec((cout, tm), lambda i: (0, i)),
                   pl.BlockSpec((cout, 128), lambda i: (0, i)),
                   pl.BlockSpec((cout, 128), lambda i: (0, i))),
        compiler_params=pltpu.CompilerParams(
            dimension_semantics=("parallel",)),
    )(wmat.astype(_MXU_DTYPE), patches.astype(_MXU_DTYPE))
    if mp != m:
        y = y[:, :m]
    return y, ps.sum(axis=1), pq.sum(axis=1)


def final_res_relu(y2, sc2, sh2, res, geo):
    cout, length = y2.shape
    tm, nblk = geo["tm"], geo["nblk"]
    main = lambda i: (0, i)
    return pl.pallas_call(
        _final_res_kernel,
        out_shape=jax.ShapeDtypeStruct((cout, length), jnp.float32),
        grid=(nblk,),
        in_specs=[pl.BlockSpec((cout, tm), main),
                  pl.BlockSpec((cout, 1), lambda i: (0, 0)),
                  pl.BlockSpec((cout, 1), lambda i: (0, 0)),
                  pl.BlockSpec((res.shape[0], tm), main)],
        out_specs=pl.BlockSpec((cout, tm), main),
        compiler_params=pltpu.CompilerParams(
            dimension_semantics=("parallel",)),
    )(y2, sc2.reshape(cout, 1), sh2.reshape(cout, 1), res)


def final_proj_relu(y2, sc2, sh2, w3, xs, b3, geo):
    cout, length = y2.shape
    cin = xs.shape[0]
    tm, nblk = geo["tm"], geo["nblk"]
    main = lambda i: (0, i)
    return pl.pallas_call(
        _final_proj_kernel,
        out_shape=jax.ShapeDtypeStruct((cout, length), jnp.float32),
        grid=(nblk,),
        in_specs=[pl.BlockSpec((cout, tm), main),
                  pl.BlockSpec((cout, 1), lambda i: (0, 0)),
                  pl.BlockSpec((cout, 1), lambda i: (0, 0)),
                  pl.BlockSpec((cout, cin), lambda i: (0, 0)),
                  pl.BlockSpec((cin, tm), main),
                  pl.BlockSpec((cout, 1), lambda i: (0, 0))],
        out_specs=pl.BlockSpec((cout, tm), main),
        compiler_params=pltpu.CompilerParams(
            dimension_semantics=("parallel",)),
    )(y2, sc2.reshape(cout, 1), sh2.reshape(cout, 1),
      w3.astype(_MXU_DTYPE), xs, b3.reshape(cout, 1))


# ----------------------------- layout / glue -----------------------------

def _geometry(n, hh, ww, cin, cout, cores):
    """Padded-flat geometry for the (N, hh+2, ww+2) grid (lane-dense layout)."""
    hp, wp = hh + 2, ww + 2
    # TODO(synk): widen the halo (or chunk rows) to support W > 125.
    assert wp + 1 <= _HALO, "padded row is longer than the 128-lane halo"
    g = n * hp * wp
    per_lane = (cin * 4 + cout * 2 + 4) * 2   # rough double-buffered bytes/lane
    tm, nblk = _choose_tiles(_HALO + g, per_lane, cores)
    return dict(hp=hp, wp=wp, g=g, tm=tm, nblk=nblk, length=tm * nblk)


def _to_padded_flat(a_cnhw, length, dtype=None):
    """[C,N,h,w] -> centered on a (h+2, w+2) zero-ring grid, flat, lane-padded."""
    c, n, hh, ww = a_cnhw.shape
    g = n * (hh + 2) * (ww + 2)
    ap = jnp.pad(a_cnhw, ((0, 0), (0, 0), (1, 1), (1, 1))).reshape(c, g)
    out = jnp.pad(ap, ((0, 0), (_HALO, length - _HALO - g)))
    return out if dtype is None else out.astype(dtype)


def _center_mask(n, hh, ww, length):
    return _to_padded_flat(jnp.ones((1, n, hh, ww), jnp.float32), length)


def _from_padded_flat(y_cl, n, hh, ww):
    c = y_cl.shape[0]
    g = n * (hh + 2) * (ww + 2)
    yg = y_cl[:, _HALO:_HALO + g].reshape(c, n, hh + 2, ww + 2)
    return jnp.transpose(yg[:, :, 1:hh + 1, 1:ww + 1], (1, 0, 2, 3))


def _tap_weights(w_oihw):
    o, i = w_oihw.shape[0], w_oihw.shape[1]
    return jnp.transpose(w_oihw, (2, 3, 0, 1)).reshape(9, o, i).astype(_MXU_DTYPE)


def conv3x3_im2col(x_cnhw, w_oihw, stride, cores):
    """Strided 3x3 conv via XLA im2col + Pallas matmul+stats (conv1, stride>1).

    TODO(synk): replace with in-kernel strided tap gather (manual
    make_async_copy / strided DMA) to remove the im2col HBM materialization.
    """
    cin, n, h, w = x_cnhw.shape
    cout = w_oihw.shape[0]
    ho = (h + 2 - 3) // stride + 1
    wo = (w + 2 - 3) // stride + 1
    xp = jnp.pad(x_cnhw, ((0, 0), (0, 0), (1, 1), (1, 1))).astype(_MXU_DTYPE)
    taps = [xp[:, :, kh:kh + stride * (ho - 1) + 1:stride,
                   kw:kw + stride * (wo - 1) + 1:stride]
            for kh in range(3) for kw in range(3)]
    patches = jnp.stack(taps, axis=0).reshape(9 * cin, n * ho * wo)
    wmat = jnp.transpose(w_oihw, (0, 2, 3, 1)).reshape(cout, 9 * cin)
    y, s, q = matmul_stats(wmat, patches, cores)
    return y, s, q, ho, wo


def bn_scale_shift(s, q, count, gamma, beta):
    """Training-mode BatchNorm scale/shift from batch statistics (biased var).

    NOTE: E[x^2] - E[x]^2 is fine at these magnitudes; a shifted / Welford
    formulation would be preferable for very large activation scales.
    """
    mean = s / count
    var = jnp.maximum(q / count - mean * mean, 0.0)
    scale = gamma / jnp.sqrt(var + _EPS)
    shift = beta - mean * scale
    return scale, shift


def residual_forward(x_nchw, p, *, use_1x1conv, strides):
    """Forward of the PyTorch Residual block (fresh module => training-mode BN)."""
    x = jnp.transpose(x_nchw, (1, 0, 2, 3)).astype(jnp.float32)  # [Cin,N,H,W]
    cin, n, h, w = x.shape
    cout = p["w1"].shape[0]
    if not use_1x1conv and (strides != 1 or cin != cout):
        raise ValueError("identity shortcut requires strides == 1 and "
                         "input_channels == num_channels")
    ho = (h + 2 - 3) // strides + 1
    wo = (w + 2 - 3) // strides + 1
    count = n * ho * wo
    cores = _cores_per_chip()

    # one padded-flat geometry for the whole block: the conv2 / output grid
    geo = _geometry(n, ho, wo, max(cin, cout), cout, cores)
    length = geo["length"]
    mask = _center_mask(n, ho, wo, length)

    x_flat = None
    if strides == 1:
        # conv1 fused (no im2col); input already lives on the output grid
        x_flat = _to_padded_flat(x, length)                      # f32 [Cin,L]
        y1, s1, q1 = fused_conv3x3(
            x_flat, mask, _tap_weights(p["w1"]),
            jnp.ones((cin, 1), jnp.float32), jnp.zeros((cin, 1), jnp.float32),
            geo, apply_act=False)
    else:
        # stride-2 conv1 via im2col + Pallas matmul+stats, then re-laid out
        y1d, s1, q1, _, _ = conv3x3_im2col(x, p["w1"], strides, cores)
        y1 = _to_padded_flat(y1d.reshape(cout, n, ho, wo), length)  # bf16
    sc1, sh1 = bn_scale_shift(s1, q1, count, p["g1"], p["be1"])

    # conv2: bn1+relu(+mask) applied to the ingested y1 window inside the kernel
    y2, s2, q2 = fused_conv3x3(
        y1, mask, _tap_weights(p["w2"]),
        sc1.reshape(cout, 1), sh1.reshape(cout, 1), geo, apply_act=True)
    sc2, sh2 = bn_scale_shift(s2, q2, count, p["g2"], p["be2"])

    # relu(bn2(y2) + shortcut), shortcut fused into the final kernel
    if use_1x1conv:
        xs = x[:, :, ::strides, ::strides]
        xs_flat = _to_padded_flat(xs, length, dtype=_MXU_DTYPE)
        out_flat = final_proj_relu(y2, sc2, sh2, p["w3"].reshape(cout, cin),
                                   xs_flat, p["b3"], geo)
    else:
        out_flat = final_res_relu(y2, sc2, sh2, x_flat, geo)

    return _from_padded_flat(out_flat, n, ho, wo)                # back to NCHW


# ----------------------------- reference (pure JAX) -----------------------------

def residual_reference(x, p, *, use_1x1conv, strides):
    hi = jax.lax.Precision.HIGHEST

    def conv(x, w, b, s, pad):
        y = jax.lax.conv_general_dilated(
            x, w, (s, s), [(pad, pad), (pad, pad)],
            dimension_numbers=("NCHW", "OIHW", "NCHW"), precision=hi)
        return y + b.reshape(1, -1, 1, 1)

    def bn(y, g, be):
        mean = jnp.mean(y, axis=(0, 2, 3), keepdims=True)
        var = jnp.var(y, axis=(0, 2, 3), keepdims=True)
        return (y - mean) / jnp.sqrt(var + _EPS) * g.reshape(1, -1, 1, 1) \
            + be.reshape(1, -1, 1, 1)

    y = jax.nn.relu(bn(conv(x, p["w1"], p["b1"], strides, 1), p["g1"], p["be1"]))
    y = bn(conv(y, p["w2"], p["b2"], 1, 1), p["g2"], p["be2"])
    xs = conv(x, p["w3"], p["b3"], strides, 0) if use_1x1conv else x
    return jax.nn.relu(y + xs)


# ----------------------------- main -----------------------------

def make_params(key, cin, cout, use_1x1conv):
    ks = jax.random.split(key, 6)
    p = {
        "w1": jax.random.normal(ks[0], (cout, cin, 3, 3), jnp.float32) * 0.1,
        "b1": jax.random.normal(ks[1], (cout,), jnp.float32) * 0.1,
        "w2": jax.random.normal(ks[2], (cout, cout, 3, 3), jnp.float32) * 0.1,
        "b2": jax.random.normal(ks[3], (cout,), jnp.float32) * 0.1,
        "g1": jnp.ones((cout,), jnp.float32),   # BatchNorm2d default init
        "be1": jnp.zeros((cout,), jnp.float32),
        "g2": jnp.ones((cout,), jnp.float32),
        "be2": jnp.zeros((cout,), jnp.float32),
    }
    if use_1x1conv:
        p["w3"] = jax.random.normal(ks[4], (cout, cin, 1, 1), jnp.float32) * 0.1
        p["b3"] = jax.random.normal(ks[5], (cout,), jnp.float32) * 0.1
    return p


if __name__ == "__main__":
    key = jax.random.PRNGKey(0)
    k_p1, k_x1, k_p2, k_x2 = jax.random.split(key, 4)

    # bf16 MXU inputs and bf16 conv intermediates vs. a pure-f32 reference.
    RTOL = ATOL = 3e-2

    # config 1: projection shortcut, stride 2
    p1 = make_params(k_p1, 4, 8, use_1x1conv=True)
    x1 = jax.random.normal(k_x1, (2, 4, 16, 16), jnp.float32)
    f1 = jax.jit(functools.partial(residual_forward, use_1x1conv=True, strides=2))
    out1 = jax.block_until_ready(f1(x1, p1))
    ref1 = residual_reference(x1, p1, use_1x1conv=True, strides=2)
    assert out1.shape == ref1.shape == (2, 8, 8, 8)
    assert jnp.allclose(out1, ref1, rtol=RTOL, atol=ATOL), \
        float(jnp.max(jnp.abs(out1 - ref1)))

    # config 2: identity shortcut, stride 1
    p2 = make_params(k_p2, 8, 8, use_1x1conv=False)
    x2 = jax.random.normal(k_x2, (2, 8, 16, 16), jnp.float32)
    f2 = jax.jit(functools.partial(residual_forward, use_1x1conv=False, strides=1))
    out2 = jax.block_until_ready(f2(x2, p2))
    ref2 = residual_reference(x2, p2, use_1x1conv=False, strides=1)
    assert out2.shape == ref2.shape == (2, 8, 16, 16)
    assert jnp.allclose(out2, ref2, rtol=RTOL, atol=ATOL), \
        float(jnp.max(jnp.abs(out2 - ref2)))

    print("KERNEL_OK")
</pallas_src>

<mosaic_0001>
module attributes {stable_mosaic.version = 11 : i64} {
  func.func @_matmul_stats_kernel(%arg0: i32, %arg1: memref<8x36xbf16, #tpu.memory_space<vmem>>, %arg2: memref<36x128xbf16, #tpu.memory_space<vmem>>, %arg3: memref<8x128xbf16, #tpu.memory_space<vmem>>, %arg4: memref<8x128xf32, #tpu.memory_space<vmem>>, %arg5: memref<8x128xf32, #tpu.memory_space<vmem>>) attributes {dimension_semantics = [#tpu.dimension_semantics<parallel>], iteration_bounds = array<i64: 1>, scalar_prefetch = 0 : i64, scratch_operands = 0 : i64, tpu.core_type = #tpu.core_type<tc>, window_params = [{pipeline_mode = #tpu.pipeline_mode<synchronous>, transform_indices = @transform_0, window_bounds = array<i64: 8, 36>}, {transform_indices = @transform_1, window_bounds = array<i64: 36, 128>}, {transform_indices = @transform_2, window_bounds = array<i64: 8, 128>}, {transform_indices = @transform_3, window_bounds = array<i64: 8, 128>}, {transform_indices = @transform_4, window_bounds = array<i64: 8, 128>}]} {
    %c0 = arith.constant 0 : index
    %c0_0 = arith.constant 0 : index
    %0 = vector.load %arg1[%c0, %c0_0] : memref<8x36xbf16, #tpu.memory_space<vmem>>, vector<8x36xbf16>
    %c0_1 = arith.constant 0 : index
    %c0_2 = arith.constant 0 : index
    %1 = vector.load %arg2[%c0_1, %c0_2] : memref<36x128xbf16, #tpu.memory_space<vmem>>, vector<36x128xbf16>
    %cst = arith.constant dense<0.000000e+00> : vector<8x128xf32>
    %2 = tpu.matmul %0, %1, %cst {dimension_numbers = #tpu.dot_dimension_numbers<[1], [0], [0], [1], [0, 0, 1, 1], [], []>} : vector<8x36xbf16>, vector<36x128xbf16>, vector<8x128xf32> -> vector<8x128xf32>
    %3 = arith.truncf %2 : vector<8x128xf32> to vector<8x128xbf16>
    %c0_3 = arith.constant 0 : index
    %c0_4 = arith.constant 0 : index
    %4 = vector.load %arg3[%c0_3, %c0_4] : memref<8x128xbf16, #tpu.memory_space<vmem>>, vector<8x128xbf16>
    tpu.vector_store %arg3[%c0_3, %c0_4], %3 {strides = array<i32>} : memref<8x128xbf16, #tpu.memory_space<vmem>>, vector<8x128xbf16>,
    %cst_5 = arith.constant 0.000000e+00 : f32
    %5 = vector.broadcast %cst_5 : f32 to vector<8x128xf32>
    %cst_6 = arith.constant 0.000000e+00 : f32
    %6 = vector.broadcast %cst_6 : f32 to vector<8x128xf32>
    %7 = arith.addf %5, %2 : vector<8x128xf32>
    %8 = arith.mulf %2, %2 : vector<8x128xf32>
    %9 = arith.addf %6, %8 : vector<8x128xf32>
    %c0_7 = arith.constant 0 : index
    %c0_8 = arith.constant 0 : index
    %10 = vector.load %arg4[%c0_7, %c0_8] : memref<8x128xf32, #tpu.memory_space<vmem>>, vector<8x128xf32>
    tpu.vector_store %arg4[%c0_7, %c0_8], %7 {strides = array<i32>} : memref<8x128xf32, #tpu.memory_space<vmem>>, vector<8x128xf32>,
    %c0_9 = arith.constant 0 : index
    %c0_10 = arith.constant 0 : index
    %11 = vector.load %arg5[%c0_9, %c0_10] : memref<8x128xf32, #tpu.memory_space<vmem>>, vector<8x128xf32>
    tpu.vector_store %arg5[%c0_9, %c0_10], %9 {strides = array<i32>} : memref<8x128xf32, #tpu.memory_space<vmem>>, vector<8x128xf32>,
    return
  }
  func.func @transform_0(%arg0: i32) -> (i32, i32) {
    %c0_i32 = arith.constant 0 : i32
    %c0_i32_0 = arith.constant 0 : i32
    %c0_i32_1 = arith.constant 0 : i32
    return %c0_i32, %c0_i32_0 : i32, i32
  }
  func.func @transform_1(%arg0: i32) -> (i32, i32) {
    %c0_i32 = arith.constant 0 : i32
    %c0_i32_0 = arith.constant 0 : i32
    return %c0_i32, %arg0 : i32, i32
  }
  func.func @transform_2(%arg0: i32) -> (i32, i32) {
    %c0_i32 = arith.constant 0 : i32
    %c0_i32_0 = arith.constant 0 : i32
    return %c0_i32, %arg0 : i32, i32
  }
  func.func @transform_3(%arg0: i32) -> (i32, i32) {
    %c0_i32 = arith.constant 0 : i32
    %c0_i32_0 = arith.constant 0 : i32
    return %c0_i32, %arg0 : i32, i32
  }
  func.func @transform_4(%arg0: i32) -> (i32, i32) {
    %c0_i32 = arith.constant 0 : i32
    %c0_i32_0 = arith.constant 0 : i32
    return %c0_i32, %arg0 : i32, i32
  }
}

module attributes {stable_mosaic.version = 11 : i64} {
  func.func @kernel(%arg0: i32, %arg1: memref<8x384xbf16, #tpu.memory_space<vmem>>, %arg2: memref<8x128xbf16, #tpu.memory_space<vmem>>, %arg3: memref<8x128xbf16, #tpu.memory_space<vmem>>, %arg4: memref<1x384xf32, #tpu.memory_space<vmem>>, %arg5: memref<1x128xf32, #tpu.memory_space<vmem>>, %arg6: memref<1x128xf32, #tpu.memory_space<vmem>>, %arg7: memref<9x8x8xbf16, #tpu.memory_space<vmem>>, %arg8: memref<8x1xf32, #tpu.memory_space<vmem>>, %arg9: memref<8x1xf32, #tpu.memory_space<vmem>>, %arg10: memref<8x384xbf16, #tpu.memory_space<vmem>>, %arg11: memref<8x128xf32, #tpu.memory_space<vmem>>, %arg12: memref<8x128xf32, #tpu.memory_space<vmem>>) attributes {dimension_semantics = [#tpu.dimension_semantics<parallel>], iteration_bounds = array<i64: 1>, scalar_prefetch = 0 : i64, scratch_operands = 0 : i64, tpu.core_type = #tpu.core_type<tc>, window_params = [{transform_indices = @transform_0, window_bounds = array<i64: 8, 384>}, {transform_indices = @transform_1, window_bounds = array<i64: 8, 128>}, {transform_indices = @transform_2, window_bounds = array<i64: 8, 128>}, {transform_indices = @transform_3, window_bounds = array<i64: 1, 384>}, {transform_indices = @transform_4, window_bounds = array<i64: 1, 128>}, {transform_indices = @transform_5, window_bounds = array<i64: 1, 128>}, {pipeline_mode = #tpu.pipeline_mode<synchronous>, transform_indices = @transform_6, window_bounds = array<i64: 9, 8, 8>}, {pipeline_mode = #tpu.pipeline_mode<synchronous>, transform_indices = @transform_7, window_bounds = array<i64: 8, 1>}, {pipeline_mode = #tpu.pipeline_mode<synchronous>, transform_indices = @transform_8, window_bounds = array<i64: 8, 1>}, {transform_indices = @transform_9, window_bounds = array<i64: 8, 384>}, {transform_indices = @transform_10, window_bounds = array<i64: 8, 128>}, {transform_indices = @transform_11, window_bounds = array<i64: 8, 128>}]} {
    %c0 = arith.constant 0 : index
    %c0_0 = arith.constant 0 : index
    %0 = vector.load %arg2[%c0, %c0_0] : memref<8x128xbf16, #tpu.memory_space<vmem>>, vector<8x128xbf16>
    %c0_1 = arith.constant 0 : index
    %c0_2 = arith.constant 0 : index
    %1 = vector.load %arg1[%c0_1, %c0_2] : memref<8x384xbf16, #tpu.memory_space<vmem>>, vector<8x384xbf16>
    %c0_3 = arith.constant 0 : index
    %c0_4 = arith.constant 0 : index
    %2 = vector.load %arg3[%c0_3, %c0_4] : memref<8x128xbf16, #tpu.memory_space<vmem>>, vector<8x128xbf16>
    %3 = tpu.concatenate %0, %1, %2 in 1 : vector<8x128xbf16>, vector<8x384xbf16>, vector<8x128xbf16> -> vector<8x640xbf16>
    %4 = arith.extf %3 : vector<8x640xbf16> to vector<8x640xf32>
    %c0_5 = arith.constant 0 : index
    %c0_6 = arith.constant 0 : index
    %5 = vector.load %arg5[%c0_5, %c0_6] : memref<1x128xf32, #tpu.memory_space<vmem>>, vector<1x128xf32>
    %c0_7 = arith.constant 0 : index
    %c0_8 = arith.constant 0 : index
    %6 = vector.load %arg4[%c0_7, %c0_8] : memref<1x384xf32, #tpu.memory_space<vmem>>, vector<1x384xf32>
    %c0_9 = arith.constant 0 : index
    %c0_10 = arith.constant 0 : index
    %7 = vector.load %arg6[%c0_9, %c0_10] : memref<1x128xf32, #tpu.memory_space<vmem>>, vector<1x128xf32>
    %8 = tpu.concatenate %5, %6, %7 in 1 : vector<1x128xf32>, vector<1x384xf32>, vector<1x128xf32> -> vector<1x640xf32>
    %c0_11 = arith.constant 0 : index
    %c0_12 = arith.constant 0 : index
    %9 = vector.load %arg8[%c0_11, %c0_12] : memref<8x1xf32, #tpu.memory_space<vmem>>, vector<8x1xf32>
    %10 = vector.broadcast %9 : vector<8x1xf32> to vector<8x640xf32>
    %11 = arith.mulf %4, %10 : vector<8x640xf32>
    %c0_13 = arith.constant 0 : index
    %c0_14 = arith.constant 0 : index
    %12 = vector.load %arg9[%c0_13, %c0_14] : memref<8x1xf32, #tpu.memory_space<vmem>>, vector<8x1xf32>
    %13 = vector.broadcast %12 : vector<8x1xf32> to vector<8x640xf32>
    %14 = arith.addf %11, %13 : vector<8x640xf32>
    %cst = arith.constant 0.000000e+00 : f32
    %15 = vector.broadcast %cst : f32 to vector<8x640xf32>
    %16 = arith.maximumf %14, %15 : vector<8x640xf32>
    %17 = vector.broadcast %8 : vector<1x640xf32> to vector<8x640xf32>
    %18 = arith.mulf %16, %17 : vector<8x640xf32>
    %19 = arith.truncf %18 : vector<8x640xf32> to vector<8x640xbf16>
    %cst_15 = arith.constant 0.000000e+00 : f32
    %20 = vector.broadcast %cst_15 : f32 to vector<8x384xf32>
    %21 = vector.extract_strided_slice %19 {offsets = [0, 117], sizes = [8, 384], strides = [1, 1]} : vector<8x640xbf16> to vector<8x384xbf16>
    %c0_16 = arith.constant 0 : index
    %c0_17 = arith.constant 0 : index
    %c0_18 = arith.constant 0 : index
    %22 = vector.load %arg7[%c0_16, %c0_17, %c0_18] : memref<9x8x8xbf16, #tpu.memory_space<vmem>>, vector<1x8x8xbf16>
    %23 = vector.shape_cast %22 : vector<1x8x8xbf16> to vector<8x8xbf16>
    %cst_19 = arith.constant dense<0.000000e+00> : vector<8x384xf32>
    %24 = tpu.matmul %23, %21, %cst_19 {dimension_numbers = #tpu.dot_dimension_numbers<[1], [0], [0], [1], [0, 0, 1, 1], [], []>} : vector<8x8xbf16>, vector<8x384xbf16>, vector<8x384xf32> -> vector<8x384xf32>
    %25 = arith.addf %20, %24 : vector<8x384xf32>
    %26 = vector.extract_strided_slice %19 {offsets = [0, 118], sizes = [8, 384], strides = [1, 1]} : vector<8x640xbf16> to vector<8x384xbf16>
    %c1 = arith.constant 1 : index
    %c0_20 = arith.constant 0 : index
    %c0_21 = arith.constant 0 : index
    %27 = vector.load %arg7[%c1, %c0_20, %c0_21] : memref<9x8x8xbf16, #tpu.memory_space<vmem>>, vector<1x8x8xbf16>
    %28 = vector.shape_cast %27 : vector<1x8x8xbf16> to vector<8x8xbf16>
    %cst_22 = arith.constant dense<0.000000e+00> : vector<8x384xf32>
    %29 = tpu.matmul %28, %26, %cst_22 {dimension_numbers = #tpu.dot_dimension_numbers<[1], [0], [0], [1], [0, 0, 1, 1], [], []>} : vector<8x8xbf16>, vector<8x384xbf16>, vector<8x384xf32> -> vector<8x384xf32>
    %30 = arith.addf %25, %29 : vector<8x384xf32>
    %31 = vector.extract_strided_slice %19 {offsets = [0, 119], sizes = [8, 384], strides = [1, 1]} : vector<8x640xbf16> to vector<8x384xbf16>
    %c2 = arith.constant 2 : index
    %c0_23 = arith.constant 0 : index
    %c0_24 = arith.constant 0 : index
    %32 = vector.load %arg7[%c2, %c0_23, %c0_24] : memref<9x8x8xbf16, #tpu.memory_space<vmem>>, vector<1x8x8xbf16>
    %33 = vector.shape_cast %32 : vector<1x8x8xbf16> to vector<8x8xbf16>
    %cst_25 = arith.constant dense<0.000000e+00> : vector<8x384xf32>
    %34 = tpu.matmul %33, %31, %cst_25 {dimension_numbers = #tpu.dot_dimension_numbers<[1], [0], [0], [1], [0, 0, 1, 1], [], []>} : vector<8x8xbf16>, vector<8x384xbf16>, vector<8x384xf32> -> vector<8x384xf32>
    %35 = arith.addf %30, %34 : vector<8x384xf32>
    %36 = vector.extract_strided_slice %19 {offsets = [0, 127], sizes = [8, 384], strides = [1, 1]} : vector<8x640xbf16> to vector<8x384xbf16>
    %c3 = arith.constant 3 : index
    %c0_26 = arith.constant 0 : index
    %c0_27 = arith.constant 0 : index
    %37 = vector.load %arg7[%c3, %c0_26, %c0_27] : memref<9x8x8xbf16, #tpu.memory_space<vmem>>, vector<1x8x8xbf16>
    %38 = vector.shape_cast %37 : vector<1x8x8xbf16> to vector<8x8xbf16>
    %cst_28 = arith.constant dense<0.000000e+00> : vector<8x384xf32>
    %39 = tpu.matmul %38, %36, %cst_28 {dimension_numbers = #tpu.dot_dimension_numbers<[1], [0], [0], [1], [0, 0, 1, 1], [], []>} : vector<8x8xbf16>, vector<8x384xbf16>, vector<8x384xf32> -> vector<8x384xf32>
    %40 = arith.addf %35, %39 : vector<8x384xf32>
    %41 = vector.extract_strided_slice %19 {offsets = [0, 128], sizes = [8, 384], strides = [1, 1]} : vector<8x640xbf16> to vector<8x384xbf16>
    %c4 = arith.constant 4 : index
    %c0_29 = arith.constant 0 : index
    %c0_30 = arith.constant 0 : index
    %42 = vector.load %arg7[%c4, %c0_29, %c0_30] : memref<9x8x8xbf16, #tpu.memory_space<vmem>>, vector<1x8x8xbf16>
    %43 = vector.shape_cast %42 : vector<1x8x8xbf16> to vector<8x8xbf16>
    %cst_31 = arith.constant dense<0.000000e+00> : vector<8x384xf32>
    %44 = tpu.matmul %43, %41, %cst_31 {dimension_numbers = #tpu.dot_dimension_numbers<[1], [0], [0], [1], [0, 0, 1, 1], [], []>} : vector<8x8xbf16>, vector<8x384xbf16>, vector<8x384xf32> -> vector<8x384xf32>
    %45 = arith.addf %40, %44 : vector<8x384xf32>
    %46 = vector.extract_strided_slice %19 {offsets = [0, 129], sizes = [8, 384], strides = [1, 1]} : vector<8x640xbf16> to vector<8x384xbf16>
    %c5 = arith.constant 5 : index
    %c0_32 = arith.constant 0 : index
    %c0_33 = arith.constant 0 : index
    %47 = vector.load %arg7[%c5, %c0_32, %c0_33] : memref<9x8x8xbf16, #tpu.memory_space<vmem>>, vector<1x8x8xbf16>
    %48 = vector.shape_cast %47 : vector<1x8x8xbf16> to vector<8x8xbf16>
    %cst_34 = arith.constant dense<0.000000e+00> : vector<8x384xf32>
    %49 = tpu.matmul %48, %46, %cst_34 {dimension_numbers = #tpu.dot_dimension_numbers<[1], [0], [0], [1], [0, 0, 1, 1], [], []>} : vector<8x8xbf16>, vector<8x384xbf16>, vector<8x384xf32> -> vector<8x384xf32>
    %50 = arith.addf %45, %49 : vector<8x384xf32>
    %51 = vector.extract_strided_slice %19 {offsets = [0, 137], sizes = [8, 384], strides = [1, 1]} : vector<8x640xbf16> to vector<8x384xbf16>
    %c6 = arith.constant 6 : index
    %c0_35 = arith.constant 0 : index
    %c0_36 = arith.constant 0 : index
    %52 = vector.load %arg7[%c6, %c0_35, %c0_36] : memref<9x8x8xbf16, #tpu.memory_space<vmem>>, vector<1x8x8xbf16>
    %53 = vector.shape_cast %52 : vector<1x8x8xbf16> to vector<8x8xbf16>
    %cst_37 = arith.constant dense<0.000000e+00> : vector<8x384xf32>
    %54 = tpu.matmul %53, %51, %cst_37 {dimension_numbers = #tpu.dot_dimension_numbers<[1], [0], [0], [1], [0, 0, 1, 1], [], []>} : vector<8x8xbf16>, vector<8x384xbf16>, vector<8x384xf32> -> vector<8x384xf32>
    %55 = arith.addf %50, %54 : vector<8x384xf32>
    %56 = vector.extract_strided_slice %19 {offsets = [0, 138], sizes = [8, 384], strides = [1, 1]} : vector<8x640xbf16> to vector<8x384xbf16>
    %c7 = arith.constant 7 : index
    %c0_38 = arith.constant 0 : index
    %c0_39 = arith.constant 0 : index
    %57 = vector.load %arg7[%c7, %c0_38, %c0_39] : memref<9x8x8xbf16, #tpu.memory_space<vmem>>, vector<1x8x8xbf16>
    %58 = vector.shape_cast %57 : vector<1x8x8xbf16> to vector<8x8xbf16>
    %cst_40 = arith.constant dense<0.000000e+00> : vector<8x384xf32>
    %59 = tpu.matmul %58, %56, %cst_40 {dimension_numbers = #tpu.dot_dimension_numbers<[1], [0], [0], [1], [0, 0, 1, 1], [], []>} : vector<8x8xbf16>, vector<8x384xbf16>, vector<8x384xf32> -> vector<8x384xf32>
    %60 = arith.addf %55, %59 : vector<8x384xf32>
    %61 = vector.extract_strided_slice %19 {offsets = [0, 139], sizes = [8, 384], strides = [1, 1]} : vector<8x640xbf16> to vector<8x384xbf16>
    %c8 = arith.constant 8 : index
    %c0_41 = arith.constant 0 : index
    %c0_42 = arith.constant 0 : index
    %62 = vector.load %arg7[%c8, %c0_41, %c0_42] : memref<9x8x8xbf16, #tpu.memory_space<vmem>>, vector<1x8x8xbf16>
    %63 = vector.shape_cast %62 : vector<1x8x8xbf16> to vector<8x8xbf16>
    %cst_43 = arith.constant dense<0.000000e+00> : vector<8x384xf32>
    %64 = tpu.matmul %63, %61, %cst_43 {dimension_numbers = #tpu.dot_dimension_numbers<[1], [0], [0], [1], [0, 0, 1, 1], [], []>} : vector<8x8xbf16>, vector<8x384xbf16>, vector<8x384xf32> -> vector<8x384xf32>
    %65 = arith.addf %60, %64 : vector<8x384xf32>
    %66 = arith.truncf %65 : vector<8x384xf32> to vector<8x384xbf16>
    %c0_44 = arith.constant 0 : index
    %c0_45 = arith.constant 0 : index
    %67 = vector.load %arg10[%c0_44, %c0_45] : memref<8x384xbf16, #tpu.memory_space<vmem>>, vector<8x384xbf16>
    tpu.vector_store %arg10[%c0_44, %c0_45], %66 {strides = array<i32>} : memref<8x384xbf16, #tpu.memory_space<vmem>>, vector<8x384xbf16>,
    %c0_46 = arith.constant 0 : index
    %c0_47 = arith.constant 0 : index
    %68 = vector.load %arg4[%c0_46, %c0_47] : memref<1x384xf32, #tpu.memory_space<vmem>>, vector<1x384xf32>
    %69 = vector.broadcast %68 : vector<1x384xf32> to vector<8x384xf32>
    %70 = arith.mulf %65, %69 : vector<8x384xf32>
    %cst_48 = arith.constant 0.000000e+00 : f32
    %71 = vector.broadcast %cst_48 : f32 to vector<8x128xf32>
    %cst_49 = arith.constant 0.000000e+00 : f32
    %72 = vector.broadcast %cst_49 : f32 to vector<8x128xf32>
    %73 = vector.extract_strided_slice %70 {offsets = [0, 0], sizes = [8, 128], strides = [1, 1]} : vector<8x384xf32> to vector<8x128xf32>
    %74 = arith.addf %71, %73 : vector<8x128xf32>
    %75 = arith.mulf %73, %73 : vector<8x128xf32>
    %76 = arith.addf %72, %75 : vector<8x128xf32>
    %77 = vector.extract_strided_slice %70 {offsets = [0, 128], sizes = [8, 128], strides = [1, 1]} : vector<8x384xf32> to vector<8x128xf32>
    %78 = arith.addf %74, %77 : vector<8x128xf32>
    %79 = arith.mulf %77, %77 : vector<8x128xf32>
    %80 = arith.addf %76, %79 : vector<8x128xf32>
    %81 = vector.extract_strided_slice %70 {offsets = [0, 256], sizes = [8, 128], strides = [1, 1]} : vector<8x384xf32> to vector<8x128xf32>
    %82 = arith.addf %78, %81 : vector<8x128xf32>
    %83 = arith.mulf %81, %81 : vector<8x128xf32>
    %84 = arith.addf %80, %83 : vector<8x128xf32>
    %c0_50 = arith.constant 0 : index
    %c0_51 = arith.constant 0 : index
    %85 = vector.load %arg11[%c0_50, %c0_51] : memref<8x128xf32, #tpu.memory_space<vmem>>, vector<8x128xf32>
    tpu.vector_store %arg11[%c0_50, %c0_51], %82 {strides = array<i32>} : memref<8x128xf32, #tpu.memory_space<vmem>>, vector<8x128xf32>,
    %c0_52 = arith.constant 0 : index
    %c0_53 = arith.constant 0 : index
    %86 = vector.load %arg12[%c0_52, %c0_53] : memref<8x128xf32, #tpu.memory_space<vmem>>, vector<8x128xf32>
    tpu.vector_store %arg12[%c0_52, %c0_53], %84 {strides = array<i32>} : memref<8x128xf32, #tpu.memory_space<vmem>>, vector<8x128xf32>,
    return
  }
  func.func @transform_0(%arg0: i32) -> (i32, i32) {
    %c0_i32 = arith.constant 0 : i32
    %c0_i32_0 = arith.constant 0 : i32
    return %c0_i32, %arg0 : i32, i32
  }
  func.func @transform_1(%arg0: i32) -> (i32, i32) {
    %c3_i32 = arith.constant 3 : i32
    %0 = arith.muli %arg0, %c3_i32 : i32
    %c1_i32 = arith.constant 1 : i32
    %1 = arith.subi %0, %c1_i32 : i32
    %c0_i32 = arith.constant 0 : i32
    %2 = arith.maxsi %1, %c0_i32 : i32
    %c0_i32_0 = arith.constant 0 : i32
    %c0_i32_1 = arith.constant 0 : i32
    return %c0_i32_0, %2 : i32, i32
  }
  func.func @transform_2(%arg0: i32) -> (i32, i32) {
    %c1_i32 = arith.constant 1 : i32
    %0 = arith.addi %arg0, %c1_i32 : i32
    %c3_i32 = arith.constant 3 : i32
    %1 = arith.muli %0, %c3_i32 : i32
    %c2_i32 = arith.constant 2 : i32
    %2 = arith.minsi %1, %c2_i32 : i32
    %c0_i32 = arith.constant 0 : i32
    %c0_i32_0 = arith.constant 0 : i32
    return %c0_i32, %2 : i32, i32
  }
  func.func @transform_3(%arg0: i32) -> (i32, i32) {
    %c0_i32 = arith.constant 0 : i32
    %c0_i32_0 = arith.constant 0 : i32
    return %c0_i32, %arg0 : i32, i32
  }
  func.func @transform_4(%arg0: i32) -> (i32, i32) {
    %c3_i32 = arith.constant 3 : i32
    %0 = arith.muli %arg0, %c3_i32 : i32
    %c1_i32 = arith.constant 1 : i32
    %1 = arith.subi %0, %c1_i32 : i32
    %c0_i32 = arith.constant 0 : i32
    %2 = arith.maxsi %1, %c0_i32 : i32
    %c0_i32_0 = arith.constant 0 : i32
    %c0_i32_1 = arith.constant 0 : i32
    return %c0_i32_0, %2 : i32, i32
  }
  func.func @transform_5(%arg0: i32) -> (i32, i32) {
    %c1_i32 = arith.constant 1 : i32
    %0 = arith.addi %arg0, %c1_i32 : i32
    %c3_i32 = arith.constant 3 : i32
    %1 = arith.muli %0, %c3_i32 : i32
    %c2_i32 = arith.constant 2 : i32
    %2 = arith.minsi %1, %c2_i32 : i32
    %c0_i32 = arith.constant 0 : i32
    %c0_i32_0 = arith.constant 0 : i32
    return %c0_i32, %2 : i32, i32
  }
  func.func @transform_6(%arg0: i32) -> (i32, i32, i32) {
    %c0_i32 = arith.constant 0 : i32
    %c0_i32_0 = arith.constant 0 : i32
    %c0_i32_1 = arith.constant 0 : i32
    %c0_i32_2 = arith.constant 0 : i32
    return %c0_i32, %c0_i32_0, %c0_i32_1 : i32, i32, i32
  }
  func.func @transform_7(%arg0: i32) -> (i32, i32) {
    %c0_i32 = arith.constant 0 : i32
    %c0_i32_0 = arith.constant 0 : i32
    %c0_i32_1 = arith.constant 0 : i32
    return %c0_i32, %c0_i32_0 : i32, i32
  }
  func.func @transform_8(%arg0: i32) -> (i32, i32) {
    %c0_i32 = arith.constant 0 : i32
    %c0_i32_0 = arith.constant 0 : i32
    %c0_i32_1 = arith.constant 0 : i32
    return %c0_i32, %c0_i32_0 : i32, i32
  }
  func.func @transform_9(%arg0: i32) -> (i32, i32) {
    %c0_i32 = arith.constant 0 : i32
    %c0_i32_0 = arith.constant 0 : i32
    return %c0_i32, %arg0 : i32, i32
  }
  func.func @transform_10(%arg0: i32) -> (i32, i32) {
    %c0_i32 = arith.constant 0 : i32
    %c0_i32_0 = arith.constant 0 : i32
    return %c0_i32, %arg0 : i32, i32
  }
  func.func @transform_11(%arg0: i32) -> (i32, i32) {
    %c0_i32 = arith.constant 0 : i32
    %c0_i32_0 = arith.constant 0 : i32
    return %c0_i32, %arg0 : i32, i32
  }
}

module attributes {stable_mosaic.version = 11 : i64} {
  func.func @_final_proj_kernel(%arg0: i32, %arg1: memref<8x384xbf16, #tpu.memory_space<vmem>>, %arg2: memref<8x1xf32, #tpu.memory_space<vmem>>, %arg3: memref<8x1xf32, #tpu.memory_space<vmem>>, %arg4: memref<8x4xbf16, #tpu.memory_space<vmem>>, %arg5: memref<4x384xbf16, #tpu.memory_space<vmem>>, %arg6: memref<8x1xf32, #tpu.memory_space<vmem>>, %arg7: memref<8x384xf32, #tpu.memory_space<vmem>>) attributes {dimension_semantics = [#tpu.dimension_semantics<parallel>], iteration_bounds = array<i64: 1>, scalar_prefetch = 0 : i64, scratch_operands = 0 : i64, tpu.core_type = #tpu.core_type<tc>, window_params = [{transform_indices = @transform_0, window_bounds = array<i64: 8, 384>}, {pipeline_mode = #tpu.pipeline_mode<synchronous>, transform_indices = @transform_1, window_bounds = array<i64: 8, 1>}, {pipeline_mode = #tpu.pipeline_mode<synchronous>, transform_indices = @transform_2, window_bounds = array<i64: 8, 1>}, {pipeline_mode = #tpu.pipeline_mode<synchronous>, transform_indices = @transform_3, window_bounds = array<i64: 8, 4>}, {transform_indices = @transform_4, window_bounds = array<i64: 4, 384>}, {pipeline_mode = #tpu.pipeline_mode<synchronous>, transform_indices = @transform_5, window_bounds = array<i64: 8, 1>}, {transform_indices = @transform_6, window_bounds = array<i64: 8, 384>}]} {
    %c0 = arith.constant 0 : index
    %c0_0 = arith.constant 0 : index
    %0 = vector.load %arg4[%c0, %c0_0] : memref<8x4xbf16, #tpu.memory_space<vmem>>, vector<8x4xbf16>
    %c0_1 = arith.constant 0 : index
    %c0_2 = arith.constant 0 : index
    %1 = vector.load %arg5[%c0_1, %c0_2] : memref<4x384xbf16, #tpu.memory_space<vmem>>, vector<4x384xbf16>
    %cst = arith.constant dense<0.000000e+00> : vector<8x384xf32>
    %2 = tpu.matmul %0, %1, %cst {dimension_numbers = #tpu.dot_dimension_numbers<[1], [0], [0], [1], [0, 0, 1, 1], [], []>} : vector<8x4xbf16>, vector<4x384xbf16>, vector<8x384xf32> -> vector<8x384xf32>
    %c0_3 = arith.constant 0 : index
    %c0_4 = arith.constant 0 : index
    %3 = vector.load %arg6[%c0_3, %c0_4] : memref<8x1xf32, #tpu.memory_space<vmem>>, vector<8x1xf32>
    %4 = vector.broadcast %3 : vector<8x1xf32> to vector<8x384xf32>
    %5 = arith.addf %2, %4 : vector<8x384xf32>
    %c0_5 = arith.constant 0 : index
    %c0_6 = arith.constant 0 : index
    %6 = vector.load %arg1[%c0_5, %c0_6] : memref<8x384xbf16, #tpu.memory_space<vmem>>, vector<8x384xbf16>
    %7 = arith.extf %6 : vector<8x384xbf16> to vector<8x384xf32>
    %c0_7 = arith.constant 0 : index
    %c0_8 = arith.constant 0 : index
    %8 = vector.load %arg2[%c0_7, %c0_8] : memref<8x1xf32, #tpu.memory_space<vmem>>, vector<8x1xf32>
    %9 = vector.broadcast %8 : vector<8x1xf32> to vector<8x384xf32>
    %10 = arith.mulf %7, %9 : vector<8x384xf32>
    %c0_9 = arith.constant 0 : index
    %c0_10 = arith.constant 0 : index
    %11 = vector.load %arg3[%c0_9, %c0_10] : memref<8x1xf32, #tpu.memory_space<vmem>>, vector<8x1xf32>
    %12 = vector.broadcast %11 : vector<8x1xf32> to vector<8x384xf32>
    %13 = arith.addf %10, %12 : vector<8x384xf32>
    %14 = arith.addf %13, %5 : vector<8x384xf32>
    %cst_11 = arith.constant 0.000000e+00 : f32
    %15 = vector.broadcast %cst_11 : f32 to vector<8x384xf32>
    %16 = arith.maximumf %14, %15 : vector<8x384xf32>
    %c0_12 = arith.constant 0 : index
    %c0_13 = arith.constant 0 : index
    %17 = vector.load %arg7[%c0_12, %c0_13] : memref<8x384xf32, #tpu.memory_space<vmem>>, vector<8x384xf32>
    tpu.vector_store %arg7[%c0_12, %c0_13], %16 {strides = array<i32>} : memref<8x384xf32, #tpu.memory_space<vmem>>, vector<8x384xf32>,
    return
  }
  func.func @transform_0(%arg0: i32) -> (i32, i32) {
    %c0_i32 = arith.constant 0 : i32
    %c0_i32_0 = arith.constant 0 : i32
    return %c0_i32, %arg0 : i32, i32
  }
  func.func @transform_1(%arg0: i32) -> (i32, i32) {
    %c0_i32 = arith.constant 0 : i32
    %c0_i32_0 = arith.constant 0 : i32
    %c0_i32_1 = arith.constant 0 : i32
    return %c0_i32, %c0_i32_0 : i32, i32
  }
  func.func @transform_2(%arg0: i32) -> (i32, i32) {
    %c0_i32 = arith.constant 0 : i32
    %c0_i32_0 = arith.constant 0 : i32
    %c0_i32_1 = arith.constant 0 : i32
    return %c0_i32, %c0_i32_0 : i32, i32
  }
  func.func @transform_3(%arg0: i32) -> (i32, i32) {
    %c0_i32 = arith.constant 0 : i32
    %c0_i32_0 = arith.constant 0 : i32
    %c0_i32_1 = arith.constant 0 : i32
    return %c0_i32, %c0_i32_0 : i32, i32
  }
  func.func @transform_4(%arg0: i32) -> (i32, i32) {
    %c0_i32 = arith.constant 0 : i32
    %c0_i32_0 = arith.constant 0 : i32
    return %c0_i32, %arg0 : i32, i32
  }
  func.func @transform_5(%arg0: i32) -> (i32, i32) {
    %c0_i32 = arith.constant 0 : i32
    %c0_i32_0 = arith.constant 0 : i32
    %c0_i32_1 = arith.constant 0 : i32
    return %c0_i32, %c0_i32_0 : i32, i32
  }
  func.func @transform_6(%arg0: i32) -> (i32, i32) {
    %c0_i32 = arith.constant 0 : i32
    %c0_i32_0 = arith.constant 0 : i32
    return %c0_i32, %arg0 : i32, i32
  }
}

</mosaic_0001>

<llo_original>
// kernel: residual_forward.3
$region0: #{residual_forward.3}
  #allocation0 [shape = 'u32[]', space=smem, size = 0x4, offset = 0x4, fixed_abs, tag = 'smem constant byte address 0x4 - core index']
  #allocation1 [shape = 'u32[144,128]{1,0:T(1,128)}', space=vmem, size = 0x12000, scoped, tag = 'internal scratch']
  %s0 = inlined_call_operand.vmem [shape: bf16[8,36], index: 0, kind: input, shape index: {}]
  %s1 = inlined_call_operand.vmem [shape: bf16[36,128], index: 1, kind: input, shape index: {}]
  %s2 = inlined_call_operand.vmem [shape: bf16[8,128], index: 2, kind: output, shape index: {0}]
  %s3 = inlined_call_operand.vmem [shape: f32[8,128], index: 3, kind: output, shape index: {1}]
  %s4 = inlined_call_operand.vmem [shape: f32[8,128], index: 4, kind: output, shape index: {2}]
  %5 = xla_tuple %s2, %s3, %s4
  %s6 = sld [smem:[#allocation0]]
  $region34: #{residual_forward.3} parent=0
    _
  %s8 = ssub.s32 1, %s6
  %s9 = scalar_select 0, %s8, %s6
  // Predicated region
  $region2: #{residual_forward.3} parent=0 // pred_check
    _
  $region3: #{residual_forward.3} parent=0 // pred_check_branch
    %11 = sbr.rel (0) target = $region5
  $region4: #{residual_forward.3} parent=0 // pred_region
    _
  $region5: #{residual_forward.3} parent=0 // pred_fallthru
    _
  // Predicated region
  $region6: #{residual_forward.3} parent=0 // pred_check
    _
  $region7: #{residual_forward.3} parent=0 // pred_check_branch
    %13 = sbr.rel (0) target = $region9
  $region8: #{residual_forward.3} parent=0 // pred_region
    _
  $region9: #{residual_forward.3} parent=0 // pred_fallthru
    _
  %v15 = vld [vmem:[%s0] sm:$0xf]
  %v16 = vld [vmem:[%s1] sm:$0xf]
  %v17 = vld [vmem:[%s1 + $0x4] sm:$0xf]
  %v18 = vld [vmem:[%s1 + $0x8] sm:$0xf]
  %v19 = vld [vmem:[%s1 + $0xc] sm:$0xf]
  %v20 = vld [vmem:[%s1 + $0x10] sm:$0x3]
  %v26 = vunpack.c.l.b16 %v16
  %v27 = vunpack.c.l.b16 %v17
  %v28 = vunpack.c.l.b16 %v18
  %v29 = vunpack.c.l.b16 %v19
  %v30 = vunpack.c.l.b16 %v20
  %v31 = vpack.c.b16 %v27, %v26
  %v32 = vpack.c.b16 %v29, %v28
  %v33 = vpack.c.b16 %v30, %v30
  %vm36 = vcmask 293888
  %v38 = vsel %vm36, %v15, 0
  %vm40 = vcmask 1041408
  %v42 = vsel %vm40, %v33, 0
  %44 = vmatprep.subr.bf16.mxu0 0
  %45 = vmatpush1.bf16.msra.mxu0 %v31
  %46 = vmatprep.subr.bf16.mxu0 0
  %47 = vmatpush1.bf16.msra.mxu0 %v32
  %48 = vmatprep.subr.bf16.mxu0 0
  %49 = vmatpush1.bf16.msra.mxu0 %v42
  %50 = vmatprep.subr.bf16.mxu0 0
  %51 = vmatpush1.bf16.msra.mxu0 0
  %52 = vmatprep.subr.bf16.mxu0 0
  %53 = vmatpush1.bf16.msra.mxu0 0
  %54 = vmatprep.subr.bf16.mxu0 0
  %55 = vmatpush1.bf16.msra.mxu0 0
  %56 = vmatprep.subr.bf16.mxu0 0
  %57 = vmatpush1.bf16.msra.mxu0 0
  %58 = vmatprep.subr.bf16.mxu0 0
  %59 = vmatpush1.bf16.msra.mxu0 0
  %60 = vmatprep.subr.bf16.mxu0 0
  %61 = vmatpush1.bf16.msra.mxu0 0
  %62 = vmatprep.subr.bf16.mxu0 0
  %63 = vmatpush1.bf16.msra.mxu0 0
  %64 = vmatprep.subr.bf16.mxu0 0
  %65 = vmatpush1.bf16.msra.mxu0 0
  %66 = vmatprep.subr.bf16.mxu0 0
  %67 = vmatpush1.bf16.msra.mxu0 0
  %68 = vmatprep.subr.bf16.mxu0 0
  %69 = vmatpush1.bf16.msra.mxu0 0
  %70 = vmatprep.subr.bf16.mxu0 0
  %71 = vmatpush1.bf16.msra.mxu0 0
  %72 = vmatprep.subr.bf16.mxu0 0
  %73 = vmatpush1.bf16.msra.mxu0 0
  %74 = vmatprep.subr.bf16.mxu0 0
  %75 = vmatpush1.bf16.msra.mxu0 0
  %76 = vmatprep.mubr.bf16.mxu0 0
  %77 = vmatmul.mubr.bf16.gmra.mrb[0].mxu0 %v38
  %v78 = vpop.f32.mrb[0].mxu0
  %v79 = vadd.f32 0.0, %v78
  %v80 = vpop.f32.mrb[0].mxu0
  %v81 = vpop.f32.mrb[0].mxu0
  %v82 = vpop.f32.mrb[0].mxu0
  %83 = vdwg.mxu0
  %v84 = vpack.c.bf16 %v79, %v79
  %85 = vst [vmem:[%s2] sm:$0xf] %v84
  %v86 = vadd.f32 %v79, 0.0
  %v87 = vmul.f32 %v79, %v79
  %v88 = vadd.f32 %v87, 0.0
  %89 = vst [vmem:[%s3] sm:$0xff] %v86
  %90 = vst [vmem:[%s4] sm:$0xff] %v88
  // Predicated region
  $region10: #{residual_forward.3} parent=0 // pred_check
    _
  $region11: #{residual_forward.3} parent=0 // pred_check_branch
    %92 = sbr.rel (0) target = $region13
  $region12: #{residual_forward.3} parent=0 // pred_region
    _
  $region13: #{residual_forward.3} parent=0 // pred_fallthru
    _
  // Predicated region
  $region14: #{residual_forward.3} parent=0 // pred_check
    _
  $region15: #{residual_forward.3} parent=0 // pred_check_branch
    %94 = sbr.rel (0) target = $region17
  $region16: #{residual_forward.3} parent=0 // pred_region
    _
  $region17: #{residual_forward.3} parent=0 // pred_fallthru
    _
  // Predicated region
  $region18: #{residual_forward.3} parent=0 // pred_check
    _
  $region19: #{residual_forward.3} parent=0 // pred_check_branch
    %96 = sbr.rel (0) target = $region21
  $region20: #{residual_forward.3} parent=0 // pred_region
    _
  $region21: #{residual_forward.3} parent=0 // pred_fallthru
    _
  // Predicated region
  $region22: #{residual_forward.3} parent=0 // pred_check
    _
  $region23: #{residual_forward.3} parent=0 // pred_check_branch
    %98 = sbr.rel (0) target = $region25
  $region24: #{residual_forward.3} parent=0 // pred_region
    _
  $region25: #{residual_forward.3} parent=0 // pred_fallthru
    _
  // Predicated region
  $region26: #{residual_forward.3} parent=0 // pred_check
    _
  $region27: #{residual_forward.3} parent=0 // pred_check_branch
    %100 = sbr.rel (0) target = $region29
  $region28: #{residual_forward.3} parent=0 // pred_region
    _
  $region29: #{residual_forward.3} parent=0 // pred_fallthru
    _
  // Predicated region
  $region30: #{residual_forward.3} parent=0 // pred_check
    _
  $region31: #{residual_forward.3} parent=0 // pred_check_branch
    %102 = sbr.rel (0) target = $region33
  $region32: #{residual_forward.3} parent=0 // pred_region
    _
  $region33: #{residual_forward.3} parent=0 // pred_fallthru
    _

// kernel: residual_forward.5
$region0: #{residual_forward.5}
  #allocation0 [shape = 'u32[]', space=smem, size = 0x4, offset = 0x4, fixed_abs, tag = 'smem constant byte address 0x4 - core index']
  #allocation1 [shape = 'u32[144,128]{1,0:T(1,128)}', space=vmem, size = 0x12000, scoped, tag = 'internal scratch']
  %s0 = inlined_call_operand.vmem [shape: bf16[8,384], index: 0, kind: input, shape index: {}]
  %s1 = inlined_call_operand.vmem [shape: f32[8,1], index: 1, kind: input, shape index: {}]
  %s2 = inlined_call_operand.vmem [shape: f32[8,1], index: 2, kind: input, shape index: {}]
  %s3 = inlined_call_operand.vmem [shape: bf16[8,4], index: 3, kind: input, shape index: {}]
  %s4 = inlined_call_operand.vmem [shape: bf16[4,384], index: 4, kind: input, shape index: {}]
  %s5 = inlined_call_operand.vmem [shape: f32[8,1], index: 5, kind: input, shape index: {}]
  %s6 = inlined_call_operand.vmem [shape: f32[8,384], index: 6, kind: output, shape index: {}]
  %s7 = sld [smem:[#allocation0]]
  $region34: #{residual_forward.5} parent=0
    _
  %s9 = ssub.s32 1, %s7
  %s10 = scalar_select 0, %s9, %s7
  // Predicated region
  $region2: #{residual_forward.5} parent=0 // pred_check
    _
  $region3: #{residual_forward.5} parent=0 // pred_check_branch
    %12 = sbr.rel (0) target = $region5
  $region4: #{residual_forward.5} parent=0 // pred_region
    _
  $region5: #{residual_forward.5} parent=0 // pred_fallthru
    _
  // Predicated region
  $region6: #{residual_forward.5} parent=0 // pred_check
    _
  $region7: #{residual_forward.5} parent=0 // pred_check_branch
    %14 = sbr.rel (0) target = $region9
  $region8: #{residual_forward.5} parent=0 // pred_region
    _
  $region9: #{residual_forward.5} parent=0 // pred_fallthru
    _
  // Predicated region
  $region10: #{residual_forward.5} parent=0 // pred_check
    _
  $region11: #{residual_forward.5} parent=0 // pred_check_branch
    %16 = sbr.rel (0) target = $region13
  $region12: #{residual_forward.5} parent=0 // pred_region
    _
  $region13: #{residual_forward.5} parent=0 // pred_fallthru
    _
  // Predicated region
  $region14: #{residual_forward.5} parent=0 // pred_check
    _
  $region15: #{residual_forward.5} parent=0 // pred_check_branch
    %18 = sbr.rel (0) target = $region17
  $region16: #{residual_forward.5} parent=0 // pred_region
    _
  $region17: #{residual_forward.5} parent=0 // pred_fallthru
    _
  // Predicated region
  $region18: #{residual_forward.5} parent=0 // pred_check
    _
  $region19: #{residual_forward.5} parent=0 // pred_check_branch
    %20 = sbr.rel (0) target = $region21
  $region20: #{residual_forward.5} parent=0 // pred_region
    _
  $region21: #{residual_forward.5} parent=0 // pred_fallthru
    _
  // Predicated region
  $region22: #{residual_forward.5} parent=0 // pred_check
    _
  $region23: #{residual_forward.5} parent=0 // pred_check_branch
    %22 = sbr.rel (0) target = $region25
  $region24: #{residual_forward.5} parent=0 // pred_region
    _
  $region25: #{residual_forward.5} parent=0 // pred_fallthru
    _
  %v24 = vld [vmem:[%s3] sm:$0xf]
  %v25 = vld [vmem:[%s4] sm:$0x3f]
  %v26 = vld [vmem:[%s5] sm:$0xff]
  %28 = vset.pattern.permute.xlu0 0
  %29 = vperm.xlu0 %28, %v26
  %v30 = vpop.permute.xlu0 %29
  %v33 = vcombine.high %v25, %v25
  %v35 = vunpack.c.l.s4 1983009808
  %v36 = vunpack.c.0.s8 %v35
  %v37 = vlaneseq
  %v38 = vshrl.u32 %v37, 7
  %v39 = vsub.s32 %v36, %v38
  %v40 = vrot.slane %v25, %v39
  %v42 = vunpack.c.l.s4 1983009808
  %v43 = vunpack.c.0.s8 %v42
  %v44 = vlaneseq
  %v45 = vshrl.u32 %v44, 7
  %v46 = vsub.s32 %v43, %v45
  %v47 = vrot.slane %v33, %v46
  %v48 = vcombine.high %v40, %v40
  %vm49 = vcmask 31744
  %v51 = vsel %vm49, %v24, 0
  %vm53 = vcmask 1041408
  %v55 = vsel %vm53, %v40, 0
  %v58 = vsel %vm53, %v48, 0
  %v61 = vsel %vm53, %v47, 0
  %63 = vmatprep.subr.bf16.mxu0 %v58
  %64 = vmatpush1.bf16.msra.mxu0 %v55
  %65 = vmatprep.subr.bf16.mxu0 0
  %66 = vmatpush1.bf16.msra.mxu0 0
  %67 = vmatprep.subr.bf16.mxu0 0
  %68 = vmatpush1.bf16.msra.mxu0 0
  %69 = vmatprep.subr.bf16.mxu0 0
  %70 = vmatpush1.bf16.msra.mxu0 0
  %71 = vmatprep.subr.bf16.mxu0 0
  %72 = vmatpush1.bf16.msra.mxu0 0
  %73 = vmatprep.subr.bf16.mxu0 0
  %74 = vmatpush1.bf16.msra.mxu0 0
  %75 = vmatprep.subr.bf16.mxu0 0
  %76 = vmatpush1.bf16.msra.mxu0 0
  %77 = vmatprep.subr.bf16.mxu0 0
  %78 = vmatpush1.bf16.msra.mxu0 0
  %79 = vmatprep.subr.bf16.mxu0 0
  %80 = vmatpush1.bf16.msra.mxu0 0
  %81 = vmatprep.subr.bf16.mxu0 0
  %82 = vmatpush1.bf16.msra.mxu0 0
  %83 = vmatprep.subr.bf16.mxu0 0
  %84 = vmatpush1.bf16.msra.mxu0 0
  %85 = vmatprep.subr.bf16.mxu0 0
  %86 = vmatpush1.bf16.msra.mxu0 0
  %87 = vmatprep.subr.bf16.mxu0 0
  %88 = vmatpush1.bf16.msra.mxu0 0
  %89 = vmatprep.subr.bf16.mxu0 0
  %90 = vmatpush1.bf16.msra.mxu0 0
  %91 = vmatprep.subr.bf16.mxu0 0
  %92 = vmatpush1.bf16.msra.mxu0 0
  %93 = vmatprep.subr.bf16.mxu0 0
  %94 = vmatpush1.bf16.msra.mxu0 0
  %95 = vmatprep.mubr.bf16.mxu0 0
  %96 = vmatmul.mubr.bf16.gmra.mrb[0].mxu0 %v51
  %v97 = vpop.f32.mrb[0].mxu0
  %v98 = vadd.f32 %v30, %v97
  %v99 = vpop.f32.mrb[0].mxu0
  %v100 = vadd.f32 %v30, %v99
  %v101 = vpop.f32.mrb[0].mxu0
  %v102 = vpop.f32.mrb[0].mxu0
  %103 = vdwg.mxu0
  %104 = vmatprep.subr.bf16.mxu0 0
  %105 = vmatpush1.bf16.msra.mxu0 %v61
  %106 = vmatprep.subr.bf16.mxu0 0
  %107 = vmatpush1.bf16.msra.mxu0 0
  %108 = vmatprep.subr.bf16.mxu0 0
  %109 = vmatpush1.bf16.msra.mxu0 0
  %110 = vmatprep.subr.bf16.mxu0 0
  %111 = vmatpush1.bf16.msra.mxu0 0
  %112 = vmatprep.subr.bf16.mxu0 0
  %113 = vmatpush1.bf16.msra.mxu0 0
  %114 = vmatprep.subr.bf16.mxu0 0
  %115 = vmatpush1.bf16.msra.mxu0 0
  %116 = vmatprep.subr.bf16.mxu0 0
  %117 = vmatpush1.bf16.msra.mxu0 0
  %118 = vmatprep.subr.bf16.mxu0 0
  %119 = vmatpush1.bf16.msra.mxu0 0
  %120 = vmatprep.subr.bf16.mxu0 0
  %121 = vmatpush1.bf16.msra.mxu0 0
  %122 = vmatprep.subr.bf16.mxu0 0
  %123 = vmatpush1.bf16.msra.mxu0 0
  %124 = vmatprep.subr.bf16.mxu0 0
  %125 = vmatpush1.bf16.msra.mxu0 0
  %126 = vmatprep.subr.bf16.mxu0 0
  %127 = vmatpush1.bf16.msra.mxu0 0
  %128 = vmatprep.subr.bf16.mxu0 0
  %129 = vmatpush1.bf16.msra.mxu0 0
  %130 = vmatprep.subr.bf16.mxu0 0
  %131 = vmatpush1.bf16.msra.mxu0 0
  %132 = vmatprep.subr.bf16.mxu0 0
  %133 = vmatpush1.bf16.msra.mxu0 0
  %134 = vmatprep.subr.bf16.mxu0 0
  %135 = vmatpush1.bf16.msra.mxu0 0
  %136 = vmatprep.mubr.bf16.mxu0 0
  %137 = vmatmul.mubr.bf16.gmra.mrb[0].mxu0 %v51
  %v138 = vpop.f32.mrb[0].mxu0
  %v139 = vadd.f32 %v30, %v138
  %v140 = vpop.f32.mrb[0].mxu0
  %v141 = vpop.f32.mrb[0].mxu0
  %v142 = vpop.f32.mrb[0].mxu0
  %143 = vdwg.mxu0
  %v144 = vld [vmem:[%s0] sm:$0xff]
  %v145 = vld [vmem:[%s0 + $0x8] sm:$0xf]
  %v146 = vunpack.c.l.bf16 %v144
  %v147 = vunpack.c.h.bf16 %v144
  %v148 = vunpack.c.l.bf16 %v145
  %v149 = vld [vmem:[%s1] sm:$0xff]
  %151 = vset.pattern.permute.xlu0 0
  %152 = vperm.xlu0 %151, %v149
  %v153 = vpop.permute.xlu0 %152
  %v155 = vmul.f32 %v146, %v153
  %v156 = vmul.f32 %v147, %v153
  %v157 = vmul.f32 %v148, %v153
  %v158 = vld [vmem:[%s2] sm:$0xff]
  %160 = vset.pattern.permute.xlu0 0
  %161 = vperm.xlu0 %160, %v158
  %v162 = vpop.permute.xlu0 %161
  %v164 = vadd.f32 %v155, %v162
  %v165 = vadd.f32 %v156, %v162
  %v166 = vadd.f32 %v157, %v162
  %v167 = vadd.f32 %v164, %v98
  %v168 = vadd.f32 %v165, %v100
  %v169 = vadd.f32 %v166, %v139
  %v170 = vmax.f32 %v167, 0.0
  %v171 = vmax.f32 %v168, 0.0
  %v172 = vmax.f32 %v169, 0.0
  %173 = vst [vmem:[%s6] sm:$0xff] %v170
  %174 = vst [vmem:[%s6 + $0x8] sm:$0xff] %v171
  %175 = vst [vmem:[%s6 + $0x10] sm:$0xff] %v172
  // Predicated region
  $region26: #{residual_forward.5} parent=0 // pred_check
    _
  $region27: #{residual_forward.5} parent=0 // pred_check_branch
    %177 = sbr.rel (0) target = $region29
  $region28: #{residual_forward.5} parent=0 // pred_region
    _
  $region29: #{residual_forward.5} parent=0 // pred_fallthru
    _
  // Predicated region
  $region30: #{residual_forward.5} parent=0 // pred_check
    _
  $region31: #{residual_forward.5} parent=0 // pred_check_branch
    %179 = sbr.rel (0) target = $region33
  $region32: #{residual_forward.5} parent=0 // pred_region
    _
  $region33: #{residual_forward.5} parent=0 // pred_fallthru
    _

// kernel: residual_forward.4
$region0: #{residual_forward.4}
  #allocation0 [shape = 'u32[]', space=smem, size = 0x4, offset = 0x4, fixed_abs, tag = 'smem constant byte address 0x4 - core index']
  #allocation1 [shape = 'u32[144,128]{1,0:T(1,128)}', space=vmem, size = 0x12000, scoped, tag = 'internal scratch']
  %s0 = inlined_call_operand.vmem [shape: bf16[8,384], index: 0, kind: input, shape index: {}, may-alias: {0,1,2}]
  %s1 = inlined_call_operand.vmem [shape: bf16[8,384], index: 1, kind: input, shape index: {}, may-alias: {0,1,2}]
  %s2 = inlined_call_operand.vmem [shape: bf16[8,384], index: 2, kind: input, shape index: {}, may-alias: {0,1,2}]
  %s3 = inlined_call_operand.vmem [shape: f32[1,384], index: 3, kind: input, shape index: {}, may-alias: {3,4,5}]
  %s4 = inlined_call_operand.vmem [shape: f32[1,384], index: 4, kind: input, shape index: {}, may-alias: {3,4,5}]
  %s5 = inlined_call_operand.vmem [shape: f32[1,384], index: 5, kind: input, shape index: {}, may-alias: {3,4,5}]
  %s6 = inlined_call_operand.vmem [shape: bf16[9,8,8], index: 6, kind: input, shape index: {}]
  %s7 = inlined_call_operand.vmem [shape: f32[8,1], index: 7, kind: input, shape index: {}]
  %s8 = inlined_call_operand.vmem [shape: f32[8,1], index: 8, kind: input, shape index: {}]
  %s9 = inlined_call_operand.vmem [shape: bf16[8,384], index: 9, kind: output, shape index: {0}]
  %s10 = inlined_call_operand.vmem [shape: f32[8,128], index: 10, kind: output, shape index: {1}]
  %s11 = inlined_call_operand.vmem [shape: f32[8,128], index: 11, kind: output, shape index: {2}]
  %12 = xla_tuple %s9, %s10, %s11
  %s13 = sld [smem:[#allocation0]]
  $region62: #{residual_forward.4} parent=0
    _
  %s15 = ssub.s32 1, %s13
  %s16 = scalar_select 0, %s15, %s13
  // Predicated region
  $region2: #{residual_forward.4} parent=0 // pred_check
    _
  $region3: #{residual_forward.4} parent=0 // pred_check_branch
    %18 = sbr.rel (0) target = $region5
  $region4: #{residual_forward.4} parent=0 // pred_region
    _
  $region5: #{residual_forward.4} parent=0 // pred_fallthru
    _
  // Predicated region
  $region6: #{residual_forward.4} parent=0 // pred_check
    _
  $region7: #{residual_forward.4} parent=0 // pred_check_branch
    %20 = sbr.rel (0) target = $region9
  $region8: #{residual_forward.4} parent=0 // pred_region
    %s21 = smul.u32 0, 3
    %s22 = ssub.s32 %s21, 1
    %p23 = scmp.gt.s32.totalorder %s22, 0
    %s24 = scalar_select %p23, %s22, 0
    %p25 = scmp.lt.s32.totalorder %s24, 2
    %s26 = scalar_select %p25, %s24, 2
    %s27 = smul.addr %s26, 4
    %s28 = scalar_lea.vmem %s1, %s27
    %s29 = smul.u32 0, 3
    %s30 = ssub.s32 %s29, 1
    %p31 = scmp.gt.s32.totalorder %s30, 0
    %s32 = scalar_select %p31, %s30, 0
  $region9: #{residual_forward.4} parent=0 // pred_fallthru
    _
  // Predicated region
  $region10: #{residual_forward.4} parent=0 // pred_check
    _
  $region11: #{residual_forward.4} parent=0 // pred_check_branch
    %34 = sbr.rel (0) target = $region13
  $region12: #{residual_forward.4} parent=0 // pred_region
    %s35 = sadd.s32 0, 1
    %s36 = smul.u32 %s35, 3
    %p37 = scmp.lt.s32.totalorder %s36, 2
    %s38 = scalar_select %p37, %s36, 2
    %p39 = scmp.lt.s32.totalorder %s38, 2
    %s40 = scalar_select %p39, %s38, 2
    %s41 = smul.addr %s40, 4
    %s42 = scalar_lea.vmem %s2, %s41
    %s43 = sadd.s32 0, 1
    %s44 = smul.u32 %s43, 3
    %p45 = scmp.lt.s32.totalorder %s44, 2
    %s46 = scalar_select %p45, %s44, 2
  $region13: #{residual_forward.4} parent=0 // pred_fallthru
    _
  // Predicated region
  $region14: #{residual_forward.4} parent=0 // pred_check
    _
  $region15: #{residual_forward.4} parent=0 // pred_check_branch
    %48 = sbr.rel (0) target = $region17
  $region16: #{residual_forward.4} parent=0 // pred_region
    _
  $region17: #{residual_forward.4} parent=0 // pred_fallthru
    _
  // Predicated region
  $region18: #{residual_forward.4} parent=0 // pred_check
    _
  $region19: #{residual_forward.4} parent=0 // pred_check_branch
    %50 = sbr.rel (0) target = $region21
  $region20: #{residual_forward.4} parent=0 // pred_region
    %s51 = smul.u32 0, 3
    %s52 = ssub.s32 %s51, 1
    %p53 = scmp.gt.s32.totalorder %s52, 0
    %s54 = scalar_select %p53, %s52, 0
    %p55 = scmp.lt.s32.totalorder %s54, 2
    %s56 = scalar_select %p55, %s54, 2
    %s57 = scalar_lea.vmem %s4, %s56
    %s58 = smul.u32 0, 3
    %s59 = ssub.s32 %s58, 1
    %p60 = scmp.gt.s32.totalorder %s59, 0
    %s61 = scalar_select %p60, %s59, 0
  $region21: #{residual_forward.4} parent=0 // pred_fallthru
    _
  // Predicated region
  $region22: #{residual_forward.4} parent=0 // pred_check
    _
  $region23: #{residual_forward.4} parent=0 // pred_check_branch
    %63 = sbr.rel (0) target = $region25
  $region24: #{residual_forward.4} parent=0 // pred_region
    %s64 = sadd.s32 0, 1
    %s65 = smul.u32 %s64, 3
    %p66 = scmp.lt.s32.totalorder %s65, 2
    %s67 = scalar_select %p66, %s65, 2
    %p68 = scmp.lt.s32.totalorder %s67, 2
    %s69 = scalar_select %p68, %s67, 2
    %s70 = scalar_lea.vmem %s5, %s69
    %s71 = sadd.s32 0, 1
    %s72 = smul.u32 %s71, 3
    %p73 = scmp.lt.s32.totalorder %s72, 2
    %s74 = scalar_select %p73, %s72, 2
  $region25: #{residual_forward.4} parent=0 // pred_fallthru
    _
  // Predicated region
  $region26: #{residual_forward.4} parent=0 // pred_check
    _
  $region27: #{residual_forward.4} parent=0 // pred_check_branch
    %76 = sbr.rel (0) target = $region29
  $region28: #{residual_forward.4} parent=0 // pred_region
    _
  $region29: #{residual_forward.4} parent=0 // pred_fallthru
    _
  // Predicated region
  $region30: #{residual_forward.4} parent=0 // pred_check
    _
  $region31: #{residual_forward.4} parent=0 // pred_check_branch
    %78 = sbr.rel (0) target = $region33
  $region32: #{residual_forward.4} parent=0 // pred_region
    _
  $region33: #{residual_forward.4} parent=0 // pred_fallthru
    _
  // Predicated region
  $region34: #{residual_forward.4} parent=0 // pred_check
    _
  $region35: #{residual_forward.4} parent=0 // pred_check_branch
    %80 = sbr.rel (0) target = $region37
  $region36: #{residual_forward.4} parent=0 // pred_region
    _
  $region37: #{residual_forward.4} parent=0 // pred_fallthru
    _
  %s81 = smul.u32 0, 3
  %s82 = ssub.s32 %s81, 1
  %p83 = scmp.gt.s32.totalorder %s82, 0
  %s84 = scalar_select %p83, %s82, 0
  %p85 = scmp.lt.s32.totalorder %s84, 2
  %s86 = scalar_select %p85, %s84, 2
  %s87 = smul.addr %s86, 4
  %s88 = scalar_lea.vmem %s1, %s87
  %s89 = sadd.s32 0, 1
  %s90 = smul.u32 %s89, 3
  %p91 = scmp.lt.s32.totalorder %s90, 2
  %s92 = scalar_select %p91, %s90, 2
  %p93 = scmp.lt.s32.totalorder %s92, 2
  %s94 = scalar_select %p93, %s92, 2
  %s95 = smul.addr %s94, 4
  %s96 = scalar_lea.vmem %s2, %s95
  %s97 = smul.u32 0, 3
  %s98 = ssub.s32 %s97, 1
  %p99 = scmp.gt.s32.totalorder %s98, 0
  %s100 = scalar_select %p99, %s98, 0
  %p101 = scmp.lt.s32.totalorder %s100, 2
  %s102 = scalar_select %p101, %s100, 2
  %s103 = scalar_lea.vmem %s4, %s102
  %s104 = sadd.s32 0, 1
  %s105 = smul.u32 %s104, 3
  %p106 = scmp.lt.s32.totalorder %s105, 2
  %s107 = scalar_select %p106, %s105, 2
  %p108 = scmp.lt.s32.totalorder %s107, 2
  %s109 = scalar_select %p108, %s107, 2
  %s110 = scalar_lea.vmem %s5, %s109
  %s111 = smul.u32 0, 3
  %s112 = ssub.s32 %s111, 1
  %p113 = scmp.gt.s32.totalorder %s112, 0
  %s114 = scalar_select %p113, %s112, 0
  %p115 = scmp.lt.s32.totalorder %s114, 2
  %s116 = scalar_select %p115, %s114, 2
  %s117 = smul.addr %s116, 4
  %s118 = scalar_lea.vmem %s1, %s117
  %s119 = smul.u32 0, 3
  %s120 = ssub.s32 %s119, 1
  %p121 = scmp.gt.s32.totalorder %s120, 0
  %s122 = scalar_select %p121, %s120, 0
  %s123 = sadd.s32 0, 1
  %s124 = smul.u32 %s123, 3
  %p125 = scmp.lt.s32.totalorder %s124, 2
  %s126 = scalar_select %p125, %s124, 2
  %p127 = scmp.lt.s32.totalorder %s126, 2
  %s128 = scalar_select %p127, %s126, 2
  %s129 = smul.addr %s128, 4
  %s130 = scalar_lea.vmem %s2, %s129
  %s131 = sadd.s32 0, 1
  %s132 = smul.u32 %s131, 3
  %p133 = scmp.lt.s32.totalorder %s132, 2
  %s134 = scalar_select %p133, %s132, 2
  %s135 = smul.u32 0, 3
  %s136 = ssub.s32 %s135, 1
  %p137 = scmp.gt.s32.totalorder %s136, 0
  %s138 = scalar_select %p137, %s136, 0
  %p139 = scmp.lt.s32.totalorder %s138, 2
  %s140 = scalar_select %p139, %s138, 2
  %s141 = scalar_lea.vmem %s4, %s140
  %s142 = smul.u32 0, 3
  %s143 = ssub.s32 %s142, 1
  %p144 = scmp.gt.s32.totalorder %s143, 0
  %s145 = scalar_select %p144, %s143, 0
  %s146 = sadd.s32 0, 1
  %s147 = smul.u32 %s146, 3
  %p148 = scmp.lt.s32.totalorder %s147, 2
  %s149 = scalar_select %p148, %s147, 2
  %p150 = scmp.lt.s32.totalorder %s149, 2
  %s151 = scalar_select %p150, %s149, 2
  %s152 = scalar_lea.vmem %s5, %s151
  %s153 = sadd.s32 0, 1
  %s154 = smul.u32 %s153, 3
  %p155 = scmp.lt.s32.totalorder %s154, 2
  %s156 = scalar_select %p155, %s154, 2
  %v158 = vld [vmem:[%s118] sm:$0xf]
  %v159 = vld [vmem:[%s0] sm:$0xff]
  %v160 = vld [vmem:[%s0 + $0x8] sm:$0xf]
  %v161 = vld [vmem:[%s130] sm:$0xf]
  %v164 = vunpack.c.l.b16 %v159
  %v165 = vunpack.c.h.b16 %v159
  %v166 = vunpack.c.l.b16 %v160
  %v167 = vpack.c.b16 %v164, %v164
  %v168 = vpack.c.b16 %v165, %v165
  %v169 = vpack.c.b16 %v166, %v166
  %v173 = vunpack.c.l.bf16 %v158
  %v174 = vunpack.c.l.bf16 %v167
  %v175 = vunpack.c.l.bf16 %v168
  %v176 = vunpack.c.l.bf16 %v169
  %v177 = vunpack.c.l.bf16 %v161
  %v178 = vld [vmem:[%s141] sm:$0x1]
  %v179 = vld [vmem:[%s3] sm:$0x7]
  %v180 = vld [vmem:[%s152] sm:$0x1]
  %v182 = vlaneseq
  %v183 = vshrl.u32 %v182, 7
  %v184 = vsub.s32 0, %v183
  %v185 = vrot.slane %v179, %v184
  %v186 = vlaneseq
  %v187 = vshrl.u32 %v186, 7
  %v188 = vsub.s32 1, %v187
  %v189 = vrot.slane %v179, %v188
  %v190 = vlaneseq
  %v191 = vshrl.u32 %v190, 7
  %v192 = vsub.s32 2, %v191
  %v193 = vrot.slane %v179, %v192
  %v197 = vld [vmem:[%s7] sm:$0xff]
  %199 = vset.pattern.permute.xlu0 0
  %200 = vperm.xlu0 %199, %v197
  %v201 = vpop.permute.xlu0 %200
  %v203 = vmul.f32 %v173, %v201
  %v204 = vmul.f32 %v174, %v201
  %v205 = vmul.f32 %v175, %v201
  %v206 = vmul.f32 %v176, %v201
  %v207 = vmul.f32 %v177, %v201
  %v208 = vld [vmem:[%s8] sm:$0xff]
  %210 = vset.pattern.permute.xlu0 0
  %211 = vperm.xlu0 %210, %v208
  %v212 = vpop.permute.xlu0 %211
  %v214 = vadd.f32 %v203, %v212
  %v215 = vadd.f32 %v204, %v212
  %v216 = vadd.f32 %v205, %v212
  %v217 = vadd.f32 %v206, %v212
  %v218 = vadd.f32 %v207, %v212
  %v219 = vmax.f32 %v214, 0.0
  %v220 = vmax.f32 %v215, 0.0
  %v221 = vmax.f32 %v216, 0.0
  %v222 = vmax.f32 %v217, 0.0
  %v223 = vmax.f32 %v218, 0.0
  %v224 = vlaneseq
  %v225 = vshrl.u32 %v224, 7
  %v226 = vsub.s32 0, %v225
  %v227 = vrot.slane %v178, %v226
  %v228 = vlaneseq
  %v229 = vshrl.u32 %v228, 7
  %v230 = vsub.s32 0, %v229
  %v231 = vrot.slane %v185, %v230
  %v232 = vlaneseq
  %v233 = vshrl.u32 %v232, 7
  %v234 = vsub.s32 0, %v233
  %v235 = vrot.slane %v189, %v234
  %v236 = vlaneseq
  %v237 = vshrl.u32 %v236, 7
  %v238 = vsub.s32 0, %v237
  %v239 = vrot.slane %v193, %v238
  %v240 = vlaneseq
  %v241 = vshrl.u32 %v240, 7
  %v242 = vsub.s32 0, %v241
  %v243 = vrot.slane %v180, %v242
  %v244 = vmul.f32 %v219, %v227
  %v245 = vmul.f32 %v220, %v231
  %v246 = vmul.f32 %v221, %v235
  %v247 = vmul.f32 %v222, %v239
  %v248 = vmul.f32 %v223, %v243
  %v249 = vpack.c.bf16 %v244, %v244
  %v250 = vpack.c.bf16 %v245, %v245
  %v251 = vpack.c.bf16 %v246, %v246
  %v252 = vpack.c.bf16 %v247, %v247
  %v253 = vpack.c.bf16 %v248, %v248
  %v254 = vld [vmem:[%s6] sm:$0xf]
  %s255 = scalar_lea.vmem %s6, 4
  %v256 = vld [vmem:[%s255] sm:$0xf]
  %261 = vrot.lane.b32.xlu0 %v249, 10
  %v262 = vpop.permute.xlu0 %261
  %263 = vrot.lane.b32.xlu0 %v250, 10
  %v264 = vpop.permute.xlu0 %263
  %265 = vrot.lane.b32.xlu0 %v251, 10
  %v266 = vpop.permute.xlu0 %265
  %267 = vrot.lane.b32.xlu0 %v252, 10
  %v268 = vpop.permute.xlu0 %267
  %vm269 = vcmask 80896
  %v270 = vsel %vm269, %v262, %v264
  %v271 = vsel %vm269, %v264, %v266
  %v272 = vsel %vm269, %v266, %v268
  %vm273 = vcmask 64512
  %v275 = vsel %vm273, %v256, 0
  %vm277 = vcmask 1043456
  %v279 = vsel %vm277, %v270, 0
  %v282 = vsel %vm277, %v271, 0
  %v285 = vsel %vm277, %v272, 0
  %287 = vmatprep.subr.bf16.mxu0 %v282
  %288 = vmatpush1.bf16.msra.mxu0 %v279
  %289 = vmatprep.subr.bf16.mxu0 0
  %290 = vmatpush1.bf16.msra.mxu0 0
  %291 = vmatprep.subr.bf16.mxu0 0
  %292 = vmatpush1.bf16.msra.mxu0 0
  %293 = vmatprep.subr.bf16.mxu0 0
  %294 = vmatpush1.bf16.msra.mxu0 0
  %295 = vmatprep.subr.bf16.mxu0 0
  %296 = vmatpush1.bf16.msra.mxu0 0
  %297 = vmatprep.subr.bf16.mxu0 0
  %298 = vmatpush1.bf16.msra.mxu0 0
  %299 = vmatprep.subr.bf16.mxu0 0
  %300 = vmatpush1.bf16.msra.mxu0 0
  %301 = vmatprep.subr.bf16.mxu0 0
  %302 = vmatpush1.bf16.msra.mxu0 0
  %303 = vmatprep.subr.bf16.mxu0 0
  %304 = vmatpush1.bf16.msra.mxu0 0
  %305 = vmatprep.subr.bf16.mxu0 0
  %306 = vmatpush1.bf16.msra.mxu0 0
  %307 = vmatprep.subr.bf16.mxu0 0
  %308 = vmatpush1.bf16.msra.mxu0 0
  %309 = vmatprep.subr.bf16.mxu0 0
  %310 = vmatpush1.bf16.msra.mxu0 0
  %311 = vmatprep.subr.bf16.mxu0 0
  %312 = vmatpush1.bf16.msra.mxu0 0
  %313 = vmatprep.subr.bf16.mxu0 0
  %314 = vmatpush1.bf16.msra.mxu0 0
  %315 = vmatprep.subr.bf16.mxu0 0
  %316 = vmatpush1.bf16.msra.mxu0 0
  %317 = vmatprep.subr.bf16.mxu0 0
  %318 = vmatpush1.bf16.msra.mxu0 0
  %319 = vmatprep.mubr.bf16.mxu0 0
  %320 = vmatmul.mubr.bf16.gmra.mrb[0].mxu0 %v275
  %v321 = vpop.f32.mrb[0].mxu0
  %v322 = vadd.f32 0.0, %v321
  %v323 = vpop.f32.mrb[0].mxu0
  %v324 = vadd.f32 0.0, %v323
  %v325 = vpop.f32.mrb[0].mxu0
  %v326 = vpop.f32.mrb[0].mxu0
  %327 = vdwg.mxu0
  %328 = vmatprep.subr.bf16.mxu0 0
  %329 = vmatpush1.bf16.msra.mxu0 %v285
  %330 = vmatprep.subr.bf16.mxu0 0
  %331 = vmatpush1.bf16.msra.mxu0 0
  %332 = vmatprep.subr.bf16.mxu0 0
  %333 = vmatpush1.bf16.msra.mxu0 0
  %334 = vmatprep.subr.bf16.mxu0 0
  %335 = vmatpush1.bf16.msra.mxu0 0
  %336 = vmatprep.subr.bf16.mxu0 0
  %337 = vmatpush1.bf16.msra.mxu0 0
  %338 = vmatprep.subr.bf16.mxu0 0
  %339 = vmatpush1.bf16.msra.mxu0 0
  %340 = vmatprep.subr.bf16.mxu0 0
  %341 = vmatpush1.bf16.msra.mxu0 0
  %342 = vmatprep.subr.bf16.mxu0 0
  %343 = vmatpush1.bf16.msra.mxu0 0
  %344 = vmatprep.subr.bf16.mxu0 0
  %345 = vmatpush1.bf16.msra.mxu0 0
  %346 = vmatprep.subr.bf16.mxu0 0
  %347 = vmatpush1.bf16.msra.mxu0 0
  %348 = vmatprep.subr.bf16.mxu0 0
  %349 = vmatpush1.bf16.msra.mxu0 0
  %350 = vmatprep.subr.bf16.mxu0 0
  %351 = vmatpush1.bf16.msra.mxu0 0
  %352 = vmatprep.subr.bf16.mxu0 0
  %353 = vmatpush1.bf16.msra.mxu0 0
  %354 = vmatprep.subr.bf16.mxu0 0
  %355 = vmatpush1.bf16.msra.mxu0 0
  %356 = vmatprep.subr.bf16.mxu0 0
  %357 = vmatpush1.bf16.msra.mxu0 0
  %358 = vmatprep.subr.bf16.mxu0 0
  %359 = vmatpush1.bf16.msra.mxu0 0
  %360 = vmatprep.mubr.bf16.mxu0 0
  %361 = vmatmul.mubr.bf16.gmra.mrb[0].mxu0 %v275
  %v362 = vpop.f32.mrb[0].mxu0
  %v363 = vadd.f32 0.0, %v362
  %v364 = vpop.f32.mrb[0].mxu0
  %v365 = vpop.f32.mrb[0].mxu0
  %v366 = vpop.f32.mrb[0].mxu0
  %367 = vdwg.mxu0
  %368 = vrot.lane.b32.xlu0 %v249, 11
  %v369 = vpop.permute.xlu0 %368
  %370 = vrot.lane.b32.xlu0 %v250, 11
  %v371 = vpop.permute.xlu0 %370
  %372 = vrot.lane.b32.xlu0 %v251, 11
  %v373 = vpop.permute.xlu0 %372
  %374 = vrot.lane.b32.xlu0 %v252, 11
  %v375 = vpop.permute.xlu0 %374
  %vm376 = vcmask 89088
  %v377 = vsel %vm376, %v369, %v371
  %v378 = vsel %vm376, %v371, %v373
  %v379 = vsel %vm376, %v373, %v375
  %v381 = vsel %vm273, %v254, 0
  %v384 = vsel %vm277, %v377, 0
  %v387 = vsel %vm277, %v378, 0
  %v390 = vsel %vm277, %v379, 0
  %392 = vmatprep.subr.bf16.mxu0 %v387
  %393 = vmatpush1.bf16.msra.mxu0 %v384
  %394 = vmatprep.subr.bf16.mxu0 0
  %395 = vmatpush1.bf16.msra.mxu0 0
  %396 = vmatprep.subr.bf16.mxu0 0
  %397 = vmatpush1.bf16.msra.mxu0 0
  %398 = vmatprep.subr.bf16.mxu0 0
  %399 = vmatpush1.bf16.msra.mxu0 0
  %400 = vmatprep.subr.bf16.mxu0 0
  %401 = vmatpush1.bf16.msra.mxu0 0
  %402 = vmatprep.subr.bf16.mxu0 0
  %403 = vmatpush1.bf16.msra.mxu0 0
  %404 = vmatprep.subr.bf16.mxu0 0
  %405 = vmatpush1.bf16.msra.mxu0 0
  %406 = vmatprep.subr.bf16.mxu0 0
  %407 = vmatpush1.bf16.msra.mxu0 0
  %408 = vmatprep.subr.bf16.mxu0 0
  %409 = vmatpush1.bf16.msra.mxu0 0
  %410 = vmatprep.subr.bf16.mxu0 0
  %411 = vmatpush1.bf16.msra.mxu0 0
  %412 = vmatprep.subr.bf16.mxu0 0
  %413 = vmatpush1.bf16.msra.mxu0 0
  %414 = vmatprep.subr.bf16.mxu0 0
  %415 = vmatpush1.bf16.msra.mxu0 0
  %416 = vmatprep.subr.bf16.mxu0 0
  %417 = vmatpush1.bf16.msra.mxu0 0
  %418 = vmatprep.subr.bf16.mxu0 0
  %419 = vmatpush1.bf16.msra.mxu0 0
  %420 = vmatprep.subr.bf16.mxu0 0
  %421 = vmatpush1.bf16.msra.mxu0 0
  %422 = vmatprep.subr.bf16.mxu0 0
  %423 = vmatpush1.bf16.msra.mxu0 0
  %424 = vmatprep.mubr.bf16.mxu0 0
  %425 = vmatmul.mubr.bf16.gmra.mrb[0].mxu0 %v381
  %v426 = vpop.f32.mrb[0].mxu0
  %v427 = vadd.f32 %v322, %v426
  %v428 = vpop.f32.mrb[0].mxu0
  %v429 = vadd.f32 %v324, %v428
  %v430 = vpop.f32.mrb[0].mxu0
  %v431 = vpop.f32.mrb[0].mxu0
  %432 = vdwg.mxu0
  %433 = vmatprep.subr.bf16.mxu0 0
  %434 = vmatpush1.bf16.msra.mxu0 %v390
  %435 = vmatprep.subr.bf16.mxu0 0
  %436 = vmatpush1.bf16.msra.mxu0 0
  %437 = vmatprep.subr.bf16.mxu0 0
  %438 = vmatpush1.bf16.msra.mxu0 0
  %439 = vmatprep.subr.bf16.mxu0 0
  %440 = vmatpush1.bf16.msra.mxu0 0
  %441 = vmatprep.subr.bf16.mxu0 0
  %442 = vmatpush1.bf16.msra.mxu0 0
  %443 = vmatprep.subr.bf16.mxu0 0
  %444 = vmatpush1.bf16.msra.mxu0 0
  %445 = vmatprep.subr.bf16.mxu0 0
  %446 = vmatpush1.bf16.msra.mxu0 0
  %447 = vmatprep.subr.bf16.mxu0 0
  %448 = vmatpush1.bf16.msra.mxu0 0
  %449 = vmatprep.subr.bf16.mxu0 0
  %450 = vmatpush1.bf16.msra.mxu0 0
  %451 = vmatprep.subr.bf16.mxu0 0
  %452 = vmatpush1.bf16.msra.mxu0 0
  %453 = vmatprep.subr.bf16.mxu0 0
  %454 = vmatpush1.bf16.msra.mxu0 0
  %455 = vmatprep.subr.bf16.mxu0 0
  %456 = vmatpush1.bf16.msra.mxu0 0
  %457 = vmatprep.subr.bf16.mxu0 0
  %458 = vmatpush1.bf16.msra.mxu0 0
  %459 = vmatprep.subr.bf16.mxu0 0
  %460 = vmatpush1.bf16.msra.mxu0 0
  %461 = vmatprep.subr.bf16.mxu0 0
  %462 = vmatpush1.bf16.msra.mxu0 0
  %463 = vmatprep.subr.bf16.mxu0 0
  %464 = vmatpush1.bf16.msra.mxu0 0
  %465 = vmatprep.mubr.bf16.mxu0 0
  %466 = vmatmul.mubr.bf16.gmra.mrb[0].mxu0 %v381
  %v467 = vpop.f32.mrb[0].mxu0
  %v468 = vadd.f32 %v363, %v467
  %v469 = vpop.f32.mrb[0].mxu0
  %v470 = vpop.f32.mrb[0].mxu0
  %v471 = vpop.f32.mrb[0].mxu0
  %472 = vdwg.mxu0
  %s473 = scalar_lea.vmem %s6, 8
  %v474 = vld [vmem:[%s473] sm:$0xf]
  %475 = vrot.lane.b32.xlu0 %v249, 9
  %v476 = vpop.permute.xlu0 %475
  %477 = vrot.lane.b32.xlu0 %v250, 9
  %v478 = vpop.permute.xlu0 %477
  %479 = vrot.lane.b32.xlu0 %v251, 9
  %v480 = vpop.permute.xlu0 %479
  %481 = vrot.lane.b32.xlu0 %v252, 9
  %v482 = vpop.permute.xlu0 %481
  %vm483 = vcmask 72704
  %v484 = vsel %vm483, %v476, %v478
  %v485 = vsel %vm483, %v478, %v480
  %v486 = vsel %vm483, %v480, %v482
  %v488 = vsel %vm273, %v474, 0
  %v491 = vsel %vm277, %v484, 0
  %v494 = vsel %vm277, %v485, 0
  %v497 = vsel %vm277, %v486, 0
  %499 = vmatprep.subr.bf16.mxu0 %v494
  %500 = vmatpush1.bf16.msra.mxu0 %v491
  %501 = vmatprep.subr.bf16.mxu0 0
  %502 = vmatpush1.bf16.msra.mxu0 0
  %503 = vmatprep.subr.bf16.mxu0 0
  %504 = vmatpush1.bf16.msra.mxu0 0
  %505 = vmatprep.subr.bf16.mxu0 0
  %506 = vmatpush1.bf16.msra.mxu0 0
  %507 = vmatprep.subr.bf16.mxu0 0
  %508 = vmatpush1.bf16.msra.mxu0 0
  %509 = vmatprep.subr.bf16.mxu0 0
  %510 = vmatpush1.bf16.msra.mxu0 0
  %511 = vmatprep.subr.bf16.mxu0 0
  %512 = vmatpush1.bf16.msra.mxu0 0
  %513 = vmatprep.subr.bf16.mxu0 0
  %514 = vmatpush1.bf16.msra.mxu0 0
  %515 = vmatprep.subr.bf16.mxu0 0
  %516 = vmatpush1.bf16.msra.mxu0 0
  %517 = vmatprep.subr.bf16.mxu0 0
  %518 = vmatpush1.bf16.msra.mxu0 0
  %519 = vmatprep.subr.bf16.mxu0 0
  %520 = vmatpush1.bf16.msra.mxu0 0
  %521 = vmatprep.subr.bf16.mxu0 0
  %522 = vmatpush1.bf16.msra.mxu0 0
  %523 = vmatprep.subr.bf16.mxu0 0
  %524 = vmatpush1.bf16.msra.mxu0 0
  %525 = vmatprep.subr.bf16.mxu0 0
  %526 = vmatpush1.bf16.msra.mxu0 0
  %527 = vmatprep.subr.bf16.mxu0 0
  %528 = vmatpush1.bf16.msra.mxu0 0
  %529 = vmatprep.subr.bf16.mxu0 0
  %530 = vmatpush1.bf16.msra.mxu0 0
  %531 = vmatprep.mubr.bf16.mxu0 0
  %532 = vmatmul.mubr.bf16.gmra.mrb[0].mxu0 %v488
  %v533 = vpop.f32.mrb[0].mxu0
  %v534 = vadd.f32 0.0, %v533
  %v535 = vpop.f32.mrb[0].mxu0
  %v536 = vadd.f32 0.0, %v535
  %v537 = vpop.f32.mrb[0].mxu0
  %v538 = vpop.f32.mrb[0].mxu0
  %539 = vdwg.mxu0
  %540 = vmatprep.subr.bf16.mxu0 0
  %541 = vmatpush1.bf16.msra.mxu0 %v497
  %542 = vmatprep.subr.bf16.mxu0 0
  %543 = vmatpush1.bf16.msra.mxu0 0
  %544 = vmatprep.subr.bf16.mxu0 0
  %545 = vmatpush1.bf16.msra.mxu0 0
  %546 = vmatprep.subr.bf16.mxu0 0
  %547 = vmatpush1.bf16.msra.mxu0 0
  %548 = vmatprep.subr.bf16.mxu0 0
  %549 = vmatpush1.bf16.msra.mxu0 0
  %550 = vmatprep.subr.bf16.mxu0 0
  %551 = vmatpush1.bf16.msra.mxu0 0
  %552 = vmatprep.subr.bf16.mxu0 0
  %553 = vmatpush1.bf16.msra.mxu0 0
  %554 = vmatprep.subr.bf16.mxu0 0
  %555 = vmatpush1.bf16.msra.mxu0 0
  %556 = vmatprep.subr.bf16.mxu0 0
  %557 = vmatpush1.bf16.msra.mxu0 0
  %558 = vmatprep.subr.bf16.mxu0 0
  %559 = vmatpush1.bf16.msra.mxu0 0
  %560 = vmatprep.subr.bf16.mxu0 0
  %561 = vmatpush1.bf16.msra.mxu0 0
  %562 = vmatprep.subr.bf16.mxu0 0
  %563 = vmatpush1.bf16.msra.mxu0 0
  %564 = vmatprep.subr.bf16.mxu0 0
  %565 = vmatpush1.bf16.msra.mxu0 0
  %566 = vmatprep.subr.bf16.mxu0 0
  %567 = vmatpush1.bf16.msra.mxu0 0
  %568 = vmatprep.subr.bf16.mxu0 0
  %569 = vmatpush1.bf16.msra.mxu0 0
  %570 = vmatprep.subr.bf16.mxu0 0
  %571 = vmatpush1.bf16.msra.mxu0 0
  %572 = vmatprep.mubr.bf16.mxu0 0
  %573 = vmatmul.mubr.bf16.gmra.mrb[0].mxu0 %v488
  %v574 = vpop.f32.mrb[0].mxu0
  %v575 = vadd.f32 0.0, %v574
  %v576 = vpop.f32.mrb[0].mxu0
  %v577 = vpop.f32.mrb[0].mxu0
  %v578 = vpop.f32.mrb[0].mxu0
  %579 = vdwg.mxu0
  %v580 = vadd.f32 %v427, %v534
  %v581 = vadd.f32 %v429, %v536
  %v582 = vadd.f32 %v468, %v575
  %s583 = scalar_lea.vmem %s6, 12
  %v584 = vld [vmem:[%s583] sm:$0xf]
  %585 = vrot.lane.b32.xlu0 %v249, 1
  %v586 = vpop.permute.xlu0 %585
  %587 = vrot.lane.b32.xlu0 %v250, 1
  %v588 = vpop.permute.xlu0 %587
  %589 = vrot.lane.b32.xlu0 %v251, 1
  %v590 = vpop.permute.xlu0 %589
  %591 = vrot.lane.b32.xlu0 %v252, 1
  %v592 = vpop.permute.xlu0 %591
  %vm593 = vcmask 7168
  %v594 = vsel %vm593, %v586, %v588
  %v595 = vsel %vm593, %v588, %v590
  %v596 = vsel %vm593, %v590, %v592
  %v598 = vsel %vm273, %v584, 0
  %v601 = vsel %vm277, %v594, 0
  %v604 = vsel %vm277, %v595, 0
  %v607 = vsel %vm277, %v596, 0
  %609 = vmatprep.subr.bf16.mxu0 %v604
  %610 = vmatpush1.bf16.msra.mxu0 %v601
  %611 = vmatprep.subr.bf16.mxu0 0
  %612 = vmatpush1.bf16.msra.mxu0 0
  %613 = vmatprep.subr.bf16.mxu0 0
  %614 = vmatpush1.bf16.msra.mxu0 0
  %615 = vmatprep.subr.bf16.mxu0 0
  %616 = vmatpush1.bf16.msra.mxu0 0
  %617 = vmatprep.subr.bf16.mxu0 0
  %618 = vmatpush1.bf16.msra.mxu0 0
  %619 = vmatprep.subr.bf16.mxu0 0
  %620 = vmatpush1.bf16.msra.mxu0 0
  %621 = vmatprep.subr.bf16.mxu0 0
  %622 = vmatpush1.bf16.msra.mxu0 0
  %623 = vmatprep.subr.bf16.mxu0 0
  %624 = vmatpush1.bf16.msra.mxu0 0
  %625 = vmatprep.subr.bf16.mxu0 0
  %626 = vmatpush1.bf16.msra.mxu0 0
  %627 = vmatprep.subr.bf16.mxu0 0
  %628 = vmatpush1.bf16.msra.mxu0 0
  %629 = vmatprep.subr.bf16.mxu0 0
  %630 = vmatpush1.bf16.msra.mxu0 0
  %631 = vmatprep.subr.bf16.mxu0 0
  %632 = vmatpush1.bf16.msra.mxu0 0
  %633 = vmatprep.subr.bf16.mxu0 0
  %634 = vmatpush1.bf16.msra.mxu0 0
  %635 = vmatprep.subr.bf16.mxu0 0
  %636 = vmatpush1.bf16.msra.mxu0 0
  %637 = vmatprep.subr.bf16.mxu0 0
  %638 = vmatpush1.bf16.msra.mxu0 0
  %639 = vmatprep.subr.bf16.mxu0 0
  %640 = vmatpush1.bf16.msra.mxu0 0
  %641 = vmatprep.mubr.bf16.mxu0 0
  %642 = vmatmul.mubr.bf16.gmra.mrb[0].mxu0 %v598
  %v643 = vpop.f32.mrb[0].mxu0
  %v644 = vadd.f32 0.0, %v643
  %v645 = vpop.f32.mrb[0].mxu0
  %v646 = vadd.f32 0.0, %v645
  %v647 = vpop.f32.mrb[0].mxu0
  %v648 = vpop.f32.mrb[0].mxu0
  %649 = vdwg.mxu0
  %650 = vmatprep.subr.bf16.mxu0 0
  %651 = vmatpush1.bf16.msra.mxu0 %v607
  %652 = vmatprep.subr.bf16.mxu0 0
  %653 = vmatpush1.bf16.msra.mxu0 0
  %654 = vmatprep.subr.bf16.mxu0 0
  %655 = vmatpush1.bf16.msra.mxu0 0
  %656 = vmatprep.subr.bf16.mxu0 0
  %657 = vmatpush1.bf16.msra.mxu0 0
  %658 = vmatprep.subr.bf16.mxu0 0
  %659 = vmatpush1.bf16.msra.mxu0 0
  %660 = vmatprep.subr.bf16.mxu0 0
  %661 = vmatpush1.bf16.msra.mxu0 0
  %662 = vmatprep.subr.bf16.mxu0 0
  %663 = vmatpush1.bf16.msra.mxu0 0
  %664 = vmatprep.subr.bf16.mxu0 0
  %665 = vmatpush1.bf16.msra.mxu0 0
  %666 = vmatprep.subr.bf16.mxu0 0
  %667 = vmatpush1.bf16.msra.mxu0 0
  %668 = vmatprep.subr.bf16.mxu0 0
  %669 = vmatpush1.bf16.msra.mxu0 0
  %670 = vmatprep.subr.bf16.mxu0 0
  %671 = vmatpush1.bf16.msra.mxu0 0
  %672 = vmatprep.subr.bf16.mxu0 0
  %673 = vmatpush1.bf16.msra.mxu0 0
  %674 = vmatprep.subr.bf16.mxu0 0
  %675 = vmatpush1.bf16.msra.mxu0 0
  %676 = vmatprep.subr.bf16.mxu0 0
  %677 = vmatpush1.bf16.msra.mxu0 0
  %678 = vmatprep.subr.bf16.mxu0 0
  %679 = vmatpush1.bf16.msra.mxu0 0
  %680 = vmatprep.subr.bf16.mxu0 0
  %681 = vmatpush1.bf16.msra.mxu0 0
  %682 = vmatprep.mubr.bf16.mxu0 0
  %683 = vmatmul.mubr.bf16.gmra.mrb[0].mxu0 %v598
  %v684 = vpop.f32.mrb[0].mxu0
  %v685 = vadd.f32 0.0, %v684
  %v686 = vpop.f32.mrb[0].mxu0
  %v687 = vpop.f32.mrb[0].mxu0
  %v688 = vpop.f32.mrb[0].mxu0
  %689 = vdwg.mxu0
  %v690 = vadd.f32 %v580, %v644
  %v691 = vadd.f32 %v581, %v646
  %v692 = vadd.f32 %v582, %v685
  %s693 = scalar_lea.vmem %s6, 16
  %v694 = vld [vmem:[%s693] sm:$0xf]
  %v696 = vsel %vm273, %v694, 0
  %v699 = vsel %vm277, %v250, 0
  %v702 = vsel %vm277, %v251, 0
  %v705 = vsel %vm277, %v252, 0
  %707 = vmatprep.subr.bf16.mxu0 %v702
  %708 = vmatpush1.bf16.msra.mxu0 %v699
  %709 = vmatprep.subr.bf16.mxu0 0
  %710 = vmatpush1.bf16.msra.mxu0 0
  %711 = vmatprep.subr.bf16.mxu0 0
  %712 = vmatpush1.bf16.msra.mxu0 0
  %713 = vmatprep.subr.bf16.mxu0 0
  %714 = vmatpush1.bf16.msra.mxu0 0
  %715 = vmatprep.subr.bf16.mxu0 0
  %716 = vmatpush1.bf16.msra.mxu0 0
  %717 = vmatprep.subr.bf16.mxu0 0
  %718 = vmatpush1.bf16.msra.mxu0 0
  %719 = vmatprep.subr.bf16.mxu0 0
  %720 = vmatpush1.bf16.msra.mxu0 0
  %721 = vmatprep.subr.bf16.mxu0 0
  %722 = vmatpush1.bf16.msra.mxu0 0
  %723 = vmatprep.subr.bf16.mxu0 0
  %724 = vmatpush1.bf16.msra.mxu0 0
  %725 = vmatprep.subr.bf16.mxu0 0
  %726 = vmatpush1.bf16.msra.mxu0 0
  %727 = vmatprep.subr.bf16.mxu0 0
  %728 = vmatpush1.bf16.msra.mxu0 0
  %729 = vmatprep.subr.bf16.mxu0 0
  %730 = vmatpush1.bf16.msra.mxu0 0
  %731 = vmatprep.subr.bf16.mxu0 0
  %732 = vmatpush1.bf16.msra.mxu0 0
  %733 = vmatprep.subr.bf16.mxu0 0
  %734 = vmatpush1.bf16.msra.mxu0 0
  %735 = vmatprep.subr.bf16.mxu0 0
  %736 = vmatpush1.bf16.msra.mxu0 0
  %737 = vmatprep.subr.bf16.mxu0 0
  %738 = vmatpush1.bf16.msra.mxu0 0
  %739 = vmatprep.mubr.bf16.mxu0 0
  %740 = vmatmul.mubr.bf16.gmra.mrb[0].mxu0 %v696
  %v741 = vpop.f32.mrb[0].mxu0
  %v742 = vadd.f32 0.0, %v741
  %v743 = vpop.f32.mrb[0].mxu0
  %v744 = vadd.f32 0.0, %v743
  %v745 = vpop.f32.mrb[0].mxu0
  %v746 = vpop.f32.mrb[0].mxu0
  %747 = vdwg.mxu0
  %748 = vmatprep.subr.bf16.mxu0 0
  %749 = vmatpush1.bf16.msra.mxu0 %v705
  %750 = vmatprep.subr.bf16.mxu0 0
  %751 = vmatpush1.bf16.msra.mxu0 0
  %752 = vmatprep.subr.bf16.mxu0 0
  %753 = vmatpush1.bf16.msra.mxu0 0
  %754 = vmatprep.subr.bf16.mxu0 0
  %755 = vmatpush1.bf16.msra.mxu0 0
  %756 = vmatprep.subr.bf16.mxu0 0
  %757 = vmatpush1.bf16.msra.mxu0 0
  %758 = vmatprep.subr.bf16.mxu0 0
  %759 = vmatpush1.bf16.msra.mxu0 0
  %760 = vmatprep.subr.bf16.mxu0 0
  %761 = vmatpush1.bf16.msra.mxu0 0
  %762 = vmatprep.subr.bf16.mxu0 0
  %763 = vmatpush1.bf16.msra.mxu0 0
  %764 = vmatprep.subr.bf16.mxu0 0
  %765 = vmatpush1.bf16.msra.mxu0 0
  %766 = vmatprep.subr.bf16.mxu0 0
  %767 = vmatpush1.bf16.msra.mxu0 0
  %768 = vmatprep.subr.bf16.mxu0 0
  %769 = vmatpush1.bf16.msra.mxu0 0
  %770 = vmatprep.subr.bf16.mxu0 0
  %771 = vmatpush1.bf16.msra.mxu0 0
  %772 = vmatprep.subr.bf16.mxu0 0
  %773 = vmatpush1.bf16.msra.mxu0 0
  %774 = vmatprep.subr.bf16.mxu0 0
  %775 = vmatpush1.bf16.msra.mxu0 0
  %776 = vmatprep.subr.bf16.mxu0 0
  %777 = vmatpush1.bf16.msra.mxu0 0
  %778 = vmatprep.subr.bf16.mxu0 0
  %779 = vmatpush1.bf16.msra.mxu0 0
  %780 = vmatprep.mubr.bf16.mxu0 0
  %781 = vmatmul.mubr.bf16.gmra.mrb[0].mxu0 %v696
  %v782 = vpop.f32.mrb[0].mxu0
  %v783 = vadd.f32 0.0, %v782
  %v784 = vpop.f32.mrb[0].mxu0
  %v785 = vpop.f32.mrb[0].mxu0
  %v786 = vpop.f32.mrb[0].mxu0
  %787 = vdwg.mxu0
  %v788 = vadd.f32 %v690, %v742
  %v789 = vadd.f32 %v691, %v744
  %v790 = vadd.f32 %v692, %v783
  %s791 = scalar_lea.vmem %s6, 20
  %v792 = vld [vmem:[%s791] sm:$0xf]
  %794 = vrot.lane.b32.xlu0 %v250, 127
  %v795 = vpop.permute.xlu0 %794
  %796 = vrot.lane.b32.xlu0 %v251, 127
  %v797 = vpop.permute.xlu0 %796
  %798 = vrot.lane.b32.xlu0 %v252, 127
  %v799 = vpop.permute.xlu0 %798
  %800 = vrot.lane.b32.xlu0 %v253, 127
  %v801 = vpop.permute.xlu0 %800
  %vm802 = vcmask 1039360
  %v803 = vsel %vm802, %v795, %v797
  %v804 = vsel %vm802, %v797, %v799
  %v805 = vsel %vm802, %v799, %v801
  %v807 = vsel %vm273, %v792, 0
  %v810 = vsel %vm277, %v803, 0
  %v813 = vsel %vm277, %v804, 0
  %v816 = vsel %vm277, %v805, 0
  %818 = vmatprep.subr.bf16.mxu0 %v813
  %819 = vmatpush1.bf16.msra.mxu0 %v810
  %820 = vmatprep.subr.bf16.mxu0 0
  %821 = vmatpush1.bf16.msra.mxu0 0
  %822 = vmatprep.subr.bf16.mxu0 0
  %823 = vmatpush1.bf16.msra.mxu0 0
  %824 = vmatprep.subr.bf16.mxu0 0
  %825 = vmatpush1.bf16.msra.mxu0 0
  %826 = vmatprep.subr.bf16.mxu0 0
  %827 = vmatpush1.bf16.msra.mxu0 0
  %828 = vmatprep.subr.bf16.mxu0 0
  %829 = vmatpush1.bf16.msra.mxu0 0
  %830 = vmatprep.subr.bf16.mxu0 0
  %831 = vmatpush1.bf16.msra.mxu0 0
  %832 = vmatprep.subr.bf16.mxu0 0
  %833 = vmatpush1.bf16.msra.mxu0 0
  %834 = vmatprep.subr.bf16.mxu0 0
  %835 = vmatpush1.bf16.msra.mxu0 0
  %836 = vmatprep.subr.bf16.mxu0 0
  %837 = vmatpush1.bf16.msra.mxu0 0
  %838 = vmatprep.subr.bf16.mxu0 0
  %839 = vmatpush1.bf16.msra.mxu0 0
  %840 = vmatprep.subr.bf16.mxu0 0
  %841 = vmatpush1.bf16.msra.mxu0 0
  %842 = vmatprep.subr.bf16.mxu0 0
  %843 = vmatpush1.bf16.msra.mxu0 0
  %844 = vmatprep.subr.bf16.mxu0 0
  %845 = vmatpush1.bf16.msra.mxu0 0
  %846 = vmatprep.subr.bf16.mxu0 0
  %847 = vmatpush1.bf16.msra.mxu0 0
  %848 = vmatprep.subr.bf16.mxu0 0
  %849 = vmatpush1.bf16.msra.mxu0 0
  %850 = vmatprep.mubr.bf16.mxu0 0
  %851 = vmatmul.mubr.bf16.gmra.mrb[0].mxu0 %v807
  %v852 = vpop.f32.mrb[0].mxu0
  %v853 = vadd.f32 0.0, %v852
  %v854 = vpop.f32.mrb[0].mxu0
  %v855 = vadd.f32 0.0, %v854
  %v856 = vpop.f32.mrb[0].mxu0
  %v857 = vpop.f32.mrb[0].mxu0
  %858 = vdwg.mxu0
  %859 = vmatprep.subr.bf16.mxu0 0
  %860 = vmatpush1.bf16.msra.mxu0 %v816
  %861 = vmatprep.subr.bf16.mxu0 0
  %862 = vmatpush1.bf16.msra.mxu0 0
  %863 = vmatprep.subr.bf16.mxu0 0
  %864 = vmatpush1.bf16.msra.mxu0 0
  %865 = vmatprep.subr.bf16.mxu0 0
  %866 = vmatpush1.bf16.msra.mxu0 0
  %867 = vmatprep.subr.bf16.mxu0 0
  %868 = vmatpush1.bf16.msra.mxu0 0
  %869 = vmatprep.subr.bf16.mxu0 0
  %870 = vmatpush1.bf16.msra.mxu0 0
  %871 = vmatprep.subr.bf16.mxu0 0
  %872 = vmatpush1.bf16.msra.mxu0 0
  %873 = vmatprep.subr.bf16.mxu0 0
  %874 = vmatpush1.bf16.msra.mxu0 0
  %875 = vmatprep.subr.bf16.mxu0 0
  %876 = vmatpush1.bf16.msra.mxu0 0
  %877 = vmatprep.subr.bf16.mxu0 0
  %878 = vmatpush1.bf16.msra.mxu0 0
  %879 = vmatprep.subr.bf16.mxu0 0
  %880 = vmatpush1.bf16.msra.mxu0 0
  %881 = vmatprep.subr.bf16.mxu0 0
  %882 = vmatpush1.bf16.msra.mxu0 0
  %883 = vmatprep.subr.bf16.mxu0 0
  %884 = vmatpush1.bf16.msra.mxu0 0
  %885 = vmatprep.subr.bf16.mxu0 0
  %886 = vmatpush1.bf16.msra.mxu0 0
  %887 = vmatprep.subr.bf16.mxu0 0
  %888 = vmatpush1.bf16.msra.mxu0 0
  %889 = vmatprep.subr.bf16.mxu0 0
  %890 = vmatpush1.bf16.msra.mxu0 0
  %891 = vmatprep.mubr.bf16.mxu0 0
  %892 = vmatmul.mubr.bf16.gmra.mrb[0].mxu0 %v807
  %v893 = vpop.f32.mrb[0].mxu0
  %v894 = vadd.f32 0.0, %v893
  %v895 = vpop.f32.mrb[0].mxu0
  %v896 = vpop.f32.mrb[0].mxu0
  %v897 = vpop.f32.mrb[0].mxu0
  %898 = vdwg.mxu0
  %v899 = vadd.f32 %v788, %v853
  %v900 = vadd.f32 %v789, %v855
  %v901 = vadd.f32 %v790, %v894
  %s902 = scalar_lea.vmem %s6, 24
  %v903 = vld [vmem:[%s902] sm:$0xf]
  %904 = vrot.lane.b32.xlu0 %v250, 119
  %v905 = vpop.permute.xlu0 %904
  %906 = vrot.lane.b32.xlu0 %v251, 119
  %v907 = vpop.permute.xlu0 %906
  %908 = vrot.lane.b32.xlu0 %v252, 119
  %v909 = vpop.permute.xlu0 %908
  %910 = vrot.lane.b32.xlu0 %v253, 119
  %v911 = vpop.permute.xlu0 %910
  %vm912 = vcmask 973824
  %v913 = vsel %vm912, %v905, %v907
  %v914 = vsel %vm912, %v907, %v909
  %v915 = vsel %vm912, %v909, %v911
  %v917 = vsel %vm273, %v903, 0
  %v920 = vsel %vm277, %v913, 0
  %v923 = vsel %vm277, %v914, 0
  %v926 = vsel %vm277, %v915, 0
  %928 = vmatprep.subr.bf16.mxu0 %v923
  %929 = vmatpush1.bf16.msra.mxu0 %v920
  %930 = vmatprep.subr.bf16.mxu0 0
  %931 = vmatpush1.bf16.msra.mxu0 0
  %932 = vmatprep.subr.bf16.mxu0 0
  %933 = vmatpush1.bf16.msra.mxu0 0
  %934 = vmatprep.subr.bf16.mxu0 0
  %935 = vmatpush1.bf16.msra.mxu0 0
  %936 = vmatprep.subr.bf16.mxu0 0
  %937 = vmatpush1.bf16.msra.mxu0 0
  %938 = vmatprep.subr.bf16.mxu0 0
  %939 = vmatpush1.bf16.msra.mxu0 0
  %940 = vmatprep.subr.bf16.mxu0 0
  %941 = vmatpush1.bf16.msra.mxu0 0
  %942 = vmatprep.subr.bf16.mxu0 0
  %943 = vmatpush1.bf16.msra.mxu0 0
  %944 = vmatprep.subr.bf16.mxu0 0
  %945 = vmatpush1.bf16.msra.mxu0 0
  %946 = vmatprep.subr.bf16.mxu0 0
  %947 = vmatpush1.bf16.msra.mxu0 0
  %948 = vmatprep.subr.bf16.mxu0 0
  %949 = vmatpush1.bf16.msra.mxu0 0
  %950 = vmatprep.subr.bf16.mxu0 0
  %951 = vmatpush1.bf16.msra.mxu0 0
  %952 = vmatprep.subr.bf16.mxu0 0
  %953 = vmatpush1.bf16.msra.mxu0 0
  %954 = vmatprep.subr.bf16.mxu0 0
  %955 = vmatpush1.bf16.msra.mxu0 0
  %956 = vmatprep.subr.bf16.mxu0 0
  %957 = vmatpush1.bf16.msra.mxu0 0
  %958 = vmatprep.subr.bf16.mxu0 0
  %959 = vmatpush1.bf16.msra.mxu0 0
  %960 = vmatprep.mubr.bf16.mxu0 0
  %961 = vmatmul.mubr.bf16.gmra.mrb[0].mxu0 %v917
  %v962 = vpop.f32.mrb[0].mxu0
  %v963 = vadd.f32 0.0, %v962
  %v964 = vpop.f32.mrb[0].mxu0
  %v965 = vadd.f32 0.0, %v964
  %v966 = vpop.f32.mrb[0].mxu0
  %v967 = vpop.f32.mrb[0].mxu0
  %968 = vdwg.mxu0
  %969 = vmatprep.subr.bf16.mxu0 0
  %970 = vmatpush1.bf16.msra.mxu0 %v926
  %971 = vmatprep.subr.bf16.mxu0 0
  %972 = vmatpush1.bf16.msra.mxu0 0
  %973 = vmatprep.subr.bf16.mxu0 0
  %974 = vmatpush1.bf16.msra.mxu0 0
  %975 = vmatprep.subr.bf16.mxu0 0
  %976 = vmatpush1.bf16.msra.mxu0 0
  %977 = vmatprep.subr.bf16.mxu0 0
  %978 = vmatpush1.bf16.msra.mxu0 0
  %979 = vmatprep.subr.bf16.mxu0 0
  %980 = vmatpush1.bf16.msra.mxu0 0
  %981 = vmatprep.subr.bf16.mxu0 0
  %982 = vmatpush1.bf16.msra.mxu0 0
  %983 = vmatprep.subr.bf16.mxu0 0
  %984 = vmatpush1.bf16.msra.mxu0 0
  %985 = vmatprep.subr.bf16.mxu0 0
  %986 = vmatpush1.bf16.msra.mxu0 0
  %987 = vmatprep.subr.bf16.mxu0 0
  %988 = vmatpush1.bf16.msra.mxu0 0
  %989 = vmatprep.subr.bf16.mxu0 0
  %990 = vmatpush1.bf16.msra.mxu0 0
  %991 = vmatprep.subr.bf16.mxu0 0
  %992 = vmatpush1.bf16.msra.mxu0 0
  %993 = vmatprep.subr.bf16.mxu0 0
  %994 = vmatpush1.bf16.msra.mxu0 0
  %995 = vmatprep.subr.bf16.mxu0 0
  %996 = vmatpush1.bf16.msra.mxu0 0
  %997 = vmatprep.subr.bf16.mxu0 0
  %998 = vmatpush1.bf16.msra.mxu0 0
  %999 = vmatprep.subr.bf16.mxu0 0
  %1000 = vmatpush1.bf16.msra.mxu0 0
  %1001 = vmatprep.mubr.bf16.mxu0 0
  %1002 = vmatmul.mubr.bf16.gmra.mrb[0].mxu0 %v917
  %v1003 = vpop.f32.mrb[0].mxu0
  %v1004 = vadd.f32 0.0, %v1003
  %v1005 = vpop.f32.mrb[0].mxu0
  %v1006 = vpop.f32.mrb[0].mxu0
  %v1007 = vpop.f32.mrb[0].mxu0
  %1008 = vdwg.mxu0
  %v1009 = vadd.f32 %v899, %v963
  %v1010 = vadd.f32 %v900, %v965
  %v1011 = vadd.f32 %v901, %v1004
  %s1012 = scalar_lea.vmem %s6, 28
  %v1013 = vld [vmem:[%s1012] sm:$0xf]
  %1014 = vrot.lane.b32.xlu0 %v250, 118
  %v1015 = vpop.permute.xlu0 %1014
  %1016 = vrot.lane.b32.xlu0 %v251, 118
  %v1017 = vpop.permute.xlu0 %1016
  %1018 = vrot.lane.b32.xlu0 %v252, 118
  %v1019 = vpop.permute.xlu0 %1018
  %1020 = vrot.lane.b32.xlu0 %v253, 118
  %v1021 = vpop.permute.xlu0 %1020
  %vm1022 = vcmask 965632
  %v1023 = vsel %vm1022, %v1015, %v1017
  %v1024 = vsel %vm1022, %v1017, %v1019
  %v1025 = vsel %vm1022, %v1019, %v1021
  %v1027 = vsel %vm273, %v1013, 0
  %v1030 = vsel %vm277, %v1023, 0
  %v1033 = vsel %vm277, %v1024, 0
  %v1036 = vsel %vm277, %v1025, 0
  %1038 = vmatprep.subr.bf16.mxu0 %v1033
  %1039 = vmatpush1.bf16.msra.mxu0 %v1030
  %1040 = vmatprep.subr.bf16.mxu0 0
  %1041 = vmatpush1.bf16.msra.mxu0 0
  %1042 = vmatprep.subr.bf16.mxu0 0
  %1043 = vmatpush1.bf16.msra.mxu0 0
  %1044 = vmatprep.subr.bf16.mxu0 0
  %1045 = vmatpush1.bf16.msra.mxu0 0
  %1046 = vmatprep.subr.bf16.mxu0 0
  %1047 = vmatpush1.bf16.msra.mxu0 0
  %1048 = vmatprep.subr.bf16.mxu0 0
  %1049 = vmatpush1.bf16.msra.mxu0 0
  %1050 = vmatprep.subr.bf16.mxu0 0
  %1051 = vmatpush1.bf16.msra.mxu0 0
  %1052 = vmatprep.subr.bf16.mxu0 0
  %1053 = vmatpush1.bf16.msra.mxu0 0
  %1054 = vmatprep.subr.bf16.mxu0 0
  %1055 = vmatpush1.bf16.msra.mxu0 0
  %1056 = vmatprep.subr.bf16.mxu0 0
  %1057 = vmatpush1.bf16.msra.mxu0 0
  %1058 = vmatprep.subr.bf16.mxu0 0
  %1059 = vmatpush1.bf16.msra.mxu0 0
  %1060 = vmatprep.subr.bf16.mxu0 0
  %1061 = vmatpush1.bf16.msra.mxu0 0
  %1062 = vmatprep.subr.bf16.mxu0 0
  %1063 = vmatpush1.bf16.msra.mxu0 0
  %1064 = vmatprep.subr.bf16.mxu0 0
  %1065 = vmatpush1.bf16.msra.mxu0 0
  %1066 = vmatprep.subr.bf16.mxu0 0
  %1067 = vmatpush1.bf16.msra.mxu0 0
  %1068 = vmatprep.subr.bf16.mxu0 0
  %1069 = vmatpush1.bf16.msra.mxu0 0
  %1070 = vmatprep.mubr.bf16.mxu0 0
  %1071 = vmatmul.mubr.bf16.gmra.mrb[0].mxu0 %v1027
  %v1072 = vpop.f32.mrb[0].mxu0
  %v1073 = vadd.f32 0.0, %v1072
  %v1074 = vpop.f32.mrb[0].mxu0
  %v1075 = vadd.f32 0.0, %v1074
  %v1076 = vpop.f32.mrb[0].mxu0
  %v1077 = vpop.f32.mrb[0].mxu0
  %1078 = vdwg.mxu0
  %1079 = vmatprep.subr.bf16.mxu0 0
  %1080 = vmatpush1.bf16.msra.mxu0 %v1036
  %1081 = vmatprep.subr.bf16.mxu0 0
  %1082 = vmatpush1.bf16.msra.mxu0 0
  %1083 = vmatprep.subr.bf16.mxu0 0
  %1084 = vmatpush1.bf16.msra.mxu0 0
  %1085 = vmatprep.subr.bf16.mxu0 0
  %1086 = vmatpush1.bf16.msra.mxu0 0
  %1087 = vmatprep.subr.bf16.mxu0 0
  %1088 = vmatpush1.bf16.msra.mxu0 0
  %1089 = vmatprep.subr.bf16.mxu0 0
  %1090 = vmatpush1.bf16.msra.mxu0 0
  %1091 = vmatprep.subr.bf16.mxu0 0
  %1092 = vmatpush1.bf16.msra.mxu0 0
  %1093 = vmatprep.subr.bf16.mxu0 0
  %1094 = vmatpush1.bf16.msra.mxu0 0
  %1095 = vmatprep.subr.bf16.mxu0 0
  %1096 = vmatpush1.bf16.msra.mxu0 0
  %1097 = vmatprep.subr.bf16.mxu0 0
  %1098 = vmatpush1.bf16.msra.mxu0 0
  %1099 = vmatprep.subr.bf16.mxu0 0
  %1100 = vmatpush1.bf16.msra.mxu0 0
  %1101 = vmatprep.subr.bf16.mxu0 0
  %1102 = vmatpush1.bf16.msra.mxu0 0
  %1103 = vmatprep.subr.bf16.mxu0 0
  %1104 = vmatpush1.bf16.msra.mxu0 0
  %1105 = vmatprep.subr.bf16.mxu0 0
  %1106 = vmatpush1.bf16.msra.mxu0 0
  %1107 = vmatprep.subr.bf16.mxu0 0
  %1108 = vmatpush1.bf16.msra.mxu0 0
  %1109 = vmatprep.subr.bf16.mxu0 0
  %1110 = vmatpush1.bf16.msra.mxu0 0
  %1111 = vmatprep.mubr.bf16.mxu0 0
  %1112 = vmatmul.mubr.bf16.gmra.mrb[0].mxu0 %v1027
  %v1113 = vpop.f32.mrb[0].mxu0
  %v1114 = vadd.f32 0.0, %v1113
  %v1115 = vpop.f32.mrb[0].mxu0
  %v1116 = vpop.f32.mrb[0].mxu0
  %v1117 = vpop.f32.mrb[0].mxu0
  %1118 = vdwg.mxu0
  %v1119 = vadd.f32 %v1009, %v1073
  %v1120 = vadd.f32 %v1010, %v1075
  %v1121 = vadd.f32 %v1011, %v1114
  %s1122 = scalar_lea.vmem %s6, 32
  %v1123 = vld [vmem:[%s1122] sm:$0xf]
  %1124 = vrot.lane.b32.xlu0 %v250, 117
  %v1125 = vpop.permute.xlu0 %1124
  %1126 = vrot.lane.b32.xlu0 %v251, 117
  %v1127 = vpop.permute.xlu0 %1126
  %1128 = vrot.lane.b32.xlu0 %v252, 117
  %v1129 = vpop.permute.xlu0 %1128
  %1130 = vrot.lane.b32.xlu0 %v253, 117
  %v1131 = vpop.permute.xlu0 %1130
  %vm1132 = vcmask 957440
  %v1133 = vsel %vm1132, %v1125, %v1127
  %v1134 = vsel %vm1132, %v1127, %v1129
  %v1135 = vsel %vm1132, %v1129, %v1131
  %v1137 = vsel %vm273, %v1123, 0
  %v1140 = vsel %vm277, %v1133, 0
  %v1143 = vsel %vm277, %v1134, 0
  %v1146 = vsel %vm277, %v1135, 0
  %1148 = vmatprep.subr.bf16.mxu0 %v1143
  %1149 = vmatpush1.bf16.msra.mxu0 %v1140
  %1150 = vmatprep.subr.bf16.mxu0 0
  %1151 = vmatpush1.bf16.msra.mxu0 0
  %1152 = vmatprep.subr.bf16.mxu0 0
  %1153 = vmatpush1.bf16.msra.mxu0 0
  %1154 = vmatprep.subr.bf16.mxu0 0
  %1155 = vmatpush1.bf16.msra.mxu0 0
  %1156 = vmatprep.subr.bf16.mxu0 0
  %1157 = vmatpush1.bf16.msra.mxu0 0
  %1158 = vmatprep.subr.bf16.mxu0 0
  %1159 = vmatpush1.bf16.msra.mxu0 0
  %1160 = vmatprep.subr.bf16.mxu0 0
  %1161 = vmatpush1.bf16.msra.mxu0 0
  %1162 = vmatprep.subr.bf16.mxu0 0
  %1163 = vmatpush1.bf16.msra.mxu0 0
  %1164 = vmatprep.subr.bf16.mxu0 0
  %1165 = vmatpush1.bf16.msra.mxu0 0
  %1166 = vmatprep.subr.bf16.mxu0 0
  %1167 = vmatpush1.bf16.msra.mxu0 0
  %1168 = vmatprep.subr.bf16.mxu0 0
  %1169 = vmatpush1.bf16.msra.mxu0 0
  %1170 = vmatprep.subr.bf16.mxu0 0
  %1171 = vmatpush1.bf16.msra.mxu0 0
  %1172 = vmatprep.subr.bf16.mxu0 0
  %1173 = vmatpush1.bf16.msra.mxu0 0
  %1174 = vmatprep.subr.bf16.mxu0 0
  %1175 = vmatpush1.bf16.msra.mxu0 0
  %1176 = vmatprep.subr.bf16.mxu0 0
  %1177 = vmatpush1.bf16.msra.mxu0 0
  %1178 = vmatprep.subr.bf16.mxu0 0
  %1179 = vmatpush1.bf16.msra.mxu0 0
  %1180 = vmatprep.mubr.bf16.mxu0 0
  %1181 = vmatmul.mubr.bf16.gmra.mrb[0].mxu0 %v1137
  %v1182 = vpop.f32.mrb[0].mxu0
  %v1183 = vadd.f32 0.0, %v1182
  %v1184 = vpop.f32.mrb[0].mxu0
  %v1185 = vadd.f32 0.0, %v1184
  %v1186 = vpop.f32.mrb[0].mxu0
  %v1187 = vpop.f32.mrb[0].mxu0
  %1188 = vdwg.mxu0
  %1189 = vmatprep.subr.bf16.mxu0 0
  %1190 = vmatpush1.bf16.msra.mxu0 %v1146
  %1191 = vmatprep.subr.bf16.mxu0 0
  %1192 = vmatpush1.bf16.msra.mxu0 0
  %1193 = vmatprep.subr.bf16.mxu0 0
  %1194 = vmatpush1.bf16.msra.mxu0 0
  %1195 = vmatprep.subr.bf16.mxu0 0
  %1196 = vmatpush1.bf16.msra.mxu0 0
  %1197 = vmatprep.subr.bf16.mxu0 0
  %1198 = vmatpush1.bf16.msra.mxu0 0
  %1199 = vmatprep.subr.bf16.mxu0 0
  %1200 = vmatpush1.bf16.msra.mxu0 0
  %1201 = vmatprep.subr.bf16.mxu0 0
  %1202 = vmatpush1.bf16.msra.mxu0 0
  %1203 = vmatprep.subr.bf16.mxu0 0
  %1204 = vmatpush1.bf16.msra.mxu0 0
  %1205 = vmatprep.subr.bf16.mxu0 0
  %1206 = vmatpush1.bf16.msra.mxu0 0
  %1207 = vmatprep.subr.bf16.mxu0 0
  %1208 = vmatpush1.bf16.msra.mxu0 0
  %1209 = vmatprep.subr.bf16.mxu0 0
  %1210 = vmatpush1.bf16.msra.mxu0 0
  %1211 = vmatprep.subr.bf16.mxu0 0
  %1212 = vmatpush1.bf16.msra.mxu0 0
  %1213 = vmatprep.subr.bf16.mxu0 0
  %1214 = vmatpush1.bf16.msra.mxu0 0
  %1215 = vmatprep.subr.bf16.mxu0 0
  %1216 = vmatpush1.bf16.msra.mxu0 0
  %1217 = vmatprep.subr.bf16.mxu0 0
  %1218 = vmatpush1.bf16.msra.mxu0 0
  %1219 = vmatprep.subr.bf16.mxu0 0
  %1220 = vmatpush1.bf16.msra.mxu0 0
  %1221 = vmatprep.mubr.bf16.mxu0 0
  %1222 = vmatmul.mubr.bf16.gmra.mrb[0].mxu0 %v1137
  %v1223 = vpop.f32.mrb[0].mxu0
  %v1224 = vadd.f32 0.0, %v1223
  %v1225 = vpop.f32.mrb[0].mxu0
  %v1226 = vpop.f32.mrb[0].mxu0
  %v1227 = vpop.f32.mrb[0].mxu0
  %1228 = vdwg.mxu0
  %v1229 = vadd.f32 %v1119, %v1183
  %v1230 = vadd.f32 %v1120, %v1185
  %v1231 = vadd.f32 %v1121, %v1224
  %v1232 = vpack.c.bf16 %v1229, %v1229
  %v1233 = vpack.c.bf16 %v1230, %v1230
  %v1234 = vpack.c.bf16 %v1231, %v1231
  %v1238 = vunpack.c.l.b16 %v1232
  %v1239 = vunpack.c.l.b16 %v1233
  %v1240 = vunpack.c.l.b16 %v1234
  %v1241 = vpack.c.b16 %v1239, %v1238
  %v1242 = vpack.c.b16 %v1240, %v1240
  %1245 = vst [vmem:[%s9] sm:$0xff] %v1241
  %1246 = vst [vmem:[%s9 + $0x8] sm:$0xf] %v1242
  %v1247 = vld [vmem:[%s3] sm:$0x7]
  %v1249 = vlaneseq
  %v1250 = vshrl.u32 %v1249, 7
  %v1251 = vsub.s32 0, %v1250
  %v1252 = vrot.slane %v1247, %v1251
  %v1253 = vlaneseq
  %v1254 = vshrl.u32 %v1253, 7
  %v1255 = vsub.s32 1, %v1254
  %v1256 = vrot.slane %v1247, %v1255
  %v1257 = vlaneseq
  %v1258 = vshrl.u32 %v1257, 7
  %v1259 = vsub.s32 2, %v1258
  %v1260 = vrot.slane %v1247, %v1259
  %v1264 = vmul.f32 %v1229, %v1252
  %v1265 = vmul.f32 %v1230, %v1256
  %v1266 = vmul.f32 %v1231, %v1260
  %v1267 = vadd.f32 %v1264, 0.0
  %v1268 = vmul.f32 %v1264, %v1264
  %v1269 = vadd.f32 %v1268, 0.0
  %v1270 = vadd.f32 %v1267, %v1265
  %v1271 = vmul.f32 %v1265, %v1265
  %v1272 = vadd.f32 %v1269, %v1271
  %v1273 = vadd.f32 %v1270, %v1266
  %v1274 = vmul.f32 %v1266, %v1266
  %v1275 = vadd.f32 %v1272, %v1274
  %1276 = vst [vmem:[%s10] sm:$0xff] %v1273
  %1277 = vst [vmem:[%s11] sm:$0xff] %v1275
  // Predicated region
  $region38: #{residual_forward.4} parent=0 // pred_check
    _
  $region39: #{residual_forward.4} parent=0 // pred_check_branch
    %1279 = sbr.rel (0) target = $region41
  $region40: #{residual_forward.4} parent=0 // pred_region
    _
  $region41: #{residual_forward.4} parent=0 // pred_fallthru
    _
  // Predicated region
  $region42: #{residual_forward.4} parent=0 // pred_check
    _
  $region43: #{residual_forward.4} parent=0 // pred_check_branch
    %1281 = sbr.rel (0) target = $region45
  $region44: #{residual_forward.4} parent=0 // pred_region
    _
  $region45: #{residual_forward.4} parent=0 // pred_fallthru
    _
  // Predicated region
  $region46: #{residual_forward.4} parent=0 // pred_check
    _
  $region47: #{residual_forward.4} parent=0 // pred_check_branch
    %1283 = sbr.rel (0) target = $region49
  $region48: #{residual_forward.4} parent=0 // pred_region
    _
  $region49: #{residual_forward.4} parent=0 // pred_fallthru
    _
  // Predicated region
  $region50: #{residual_forward.4} parent=0 // pred_check
    _
  $region51: #{residual_forward.4} parent=0 // pred_check_branch
    %1285 = sbr.rel (0) target = $region53
  $region52: #{residual_forward.4} parent=0 // pred_region
    _
  $region53: #{residual_forward.4} parent=0 // pred_fallthru
    _
  // Predicated region
  $region54: #{residual_forward.4} parent=0 // pred_check
    _
  $region55: #{residual_forward.4} parent=0 // pred_check_branch
    %1287 = sbr.rel (0) target = $region57
  $region56: #{residual_forward.4} parent=0 // pred_region
    _
  $region57: #{residual_forward.4} parent=0 // pred_fallthru
    _
  // Predicated region
  $region58: #{residual_forward.4} parent=0 // pred_check
    _
  $region59: #{residual_forward.4} parent=0 // pred_check_branch
    %1289 = sbr.rel (0) target = $region61
  $region60: #{residual_forward.4} parent=0 // pred_region
    _
  $region61: #{residual_forward.4} parent=0 // pred_fallthru
    _

</llo_original>
